<compile_context>
chip_gen: v5e
topology: v5e:2x2
jax: 0.10.0
libtpu: 0.0.40
codegen_flags: <defaults>
</compile_context>

<pallas_src>
import functools

import jax
import jax.numpy as jnp
from jax import lax
from jax.experimental import pallas as pl
from jax.experimental.pallas import tpu as pltpu

EPS = 1e-6


def _pairwise_avg_rows(n):
    """(n//2, n) bf16 matrix averaging consecutive ROW pairs of its operand."""
    rr = lax.broadcasted_iota(jnp.int32, (n // 2, n), 0)
    cc = lax.broadcasted_iota(jnp.int32, (n // 2, n), 1)
    return jnp.where((cc == 2 * rr) | (cc == 2 * rr + 1), 0.5, 0.0).astype(jnp.bfloat16)


def _pairwise_avg_cols(n):
    """(n, n//2) bf16 matrix averaging consecutive COLUMN pairs of its operand."""
    rr = lax.broadcasted_iota(jnp.int32, (n, n // 2), 0)
    cc = lax.broadcasted_iota(jnp.int32, (n, n // 2), 1)
    return jnp.where((rr == 2 * cc) | (rr == 2 * cc + 1), 0.5, 0.0).astype(jnp.bfloat16)


def _channel_edge_mask(ncw, w):
    """(1, ncw-1) f32 row mask: 0 where a lane diff straddles a channel boundary."""
    col = lax.broadcasted_iota(jnp.int32, (1, ncw - 1), 1)
    if (w & (w - 1)) == 0:                      # power-of-two width: cheap bit-and
        in_ch = (col & (w - 1)) != (w - 1)
    else:
        in_ch = (col % w) != (w - 1)
    return jnp.where(in_ch, 1.0, 0.0).astype(jnp.float32)


def _exclusion_kernel(t_ref, r_ref, out_ref, *, level, eps, nc, w0):
    """Fused multi-level exclusion loss.

    t_ref, r_ref : (H, NC*W) f32 in VMEM, channels packed contiguously on lanes
    out_ref      : (1,)      f32 in SMEM, final scalar loss
    """
    t = t_ref[...]
    r = r_ref[...]
    h0, ncw0 = t.shape                         # static python ints
    w = w0                                     # per-channel width at current level

    # Downsample matrices built once; smaller levels are top-left submatrices.
    p_full = _pairwise_avg_rows(2 * h0)        # (h0, 2*h0)   sublane (H) averaging
    q_full = _pairwise_avg_cols(ncw0)          # (ncw0, ncw0/2) lane (W) averaging

    total_x = jnp.float32(0.0)
    total_y = jnp.float32(0.0)

    for lvl in range(level):                   # static -> fully unrolled
        h, ncw = t.shape

        # --- gradients: H along sublanes, W packed per-channel along lanes ---
        gx_t = t[1:, :] - t[:-1, :]
        gx_r = r[1:, :] - r[:-1, :]
        # mask lane diffs that straddle a channel boundary ONCE (tanh(0)=0, |0|=0)
        ymask = _channel_edge_mask(ncw, w)     # (1, ncw-1), broadcast on sublanes
        gy_t = (t[:, 1:] - t[:, :-1]) * ymask
        gy_r = (r[:, 1:] - r[:, :-1]) * ymask

        n_x = float((h - 1) * ncw)             # == NC*(H-1)*W   (PyTorch mean count)
        n_y = float(h * nc * (w - 1))          # == NC*H*(W-1)   (valid lane diffs)

        mean_gx_t = jnp.sum(jnp.abs(gx_t)) / n_x
        mean_gx_r = jnp.sum(jnp.abs(gx_r)) / n_x
        mean_gy_t = jnp.sum(jnp.abs(gy_t)) / n_y
        mean_gy_r = jnp.sum(jnp.abs(gy_r)) / n_y
        alphax = 2.0 * mean_gx_t / (mean_gx_r + eps)
        alphay = 2.0 * mean_gy_t / (mean_gy_r + eps)

        # sigmoid(x)*2 - 1 == tanh(x/2): one EUP op; p = g1*g2, then sum(p*p)
        px = jnp.tanh(0.5 * gx_t) * jnp.tanh((0.5 * alphax) * gx_r)
        py = jnp.tanh(0.5 * gy_t) * jnp.tanh((0.5 * alphay) * gy_r)
        mx = jnp.sum(px * px) / n_x
        my = jnp.sum(py * py) / n_y
        total_x = total_x + jnp.sqrt(jnp.sqrt(mx + eps))   # (m + eps) ** 0.25
        total_y = total_y + jnp.sqrt(jnp.sqrt(my + eps))

        # --- 0.5x bilinear downsample of BOTH images with one matmul pair ---
        if lvl < level - 1:
            x = jnp.concatenate([t, r], axis=0).astype(jnp.bfloat16)   # (2h, ncw)
            p = p_full[:h, : 2 * h]            # (h, 2h)   averages row pairs
            q = q_full[:ncw, : ncw // 2]       # (ncw, ncw/2) averages lane pairs
            z = jnp.dot(p, x, preferred_element_type=jnp.float32)      # (h, ncw)
            z = jnp.dot(z.astype(jnp.bfloat16), q,
                        preferred_element_type=jnp.float32)            # (h, ncw/2)
            h2 = h // 2
            t = z[:h2, :]                      # rows [0, h/2)   = downsampled T
            r = z[h2:, :]                      # rows [h/2, h)   = downsampled R
            w = w // 2

    # NOTE: PyTorch reference hardcodes /3 regardless of `level`; kept as-is.
    out_ref[0] = (total_x / 3.0 + total_y / 3.0) * 0.5


def exclusion_loss(img_T, img_R, level=3, eps=EPS):
    """JAX/Pallas equivalent of ExclusionLoss.forward (NCHW inputs)."""
    n, c, h, w = img_T.shape
    nc = n * c

    if (h % (1 << (level - 1))) or (w % (1 << (level - 1))):
        # TODO(synk): odd H/W at some pyramid level needs true bilinear weights.
        raise ValueError("H and W must remain even across all pyramid levels")

    # TODO(synk): for W >= 128, skip this lane-packing transpose (an extra HBM
    # read+write pass) and feed (N*C, H, W) directly; packing only pays when W
    # is small (here W=16 -> full 128-lane vregs instead of 12% occupancy).
    def pack(x):
        # (N, C, H, W) -> (H, N*C*W): fold batch*channel into the lane axis,
        # each channel's W columns contiguous.  At 2x4x16x16 this is (16, 128).
        return (x.astype(jnp.float32)
                 .reshape(nc, h, w)
                 .transpose(1, 0, 2)
                 .reshape(h, nc * w))

    kernel = functools.partial(_exclusion_kernel, level=level, eps=eps, nc=nc, w0=w)
    out = pl.pallas_call(
        kernel,
        out_shape=jax.ShapeDtypeStruct((1,), jnp.float32),
        in_specs=[pl.BlockSpec(memory_space=pltpu.MemorySpace.VMEM)] * 2,
        out_specs=pl.BlockSpec(memory_space=pltpu.MemorySpace.SMEM),
        compiler_params=pltpu.CompilerParams(vmem_limit_bytes=32 * 1024 * 1024),
    )(pack(img_T), pack(img_R))
    return out[0]


if __name__ == "__main__":
    key = jax.random.PRNGKey(0)
    k1, k2 = jax.random.split(key)
    img_T = jax.random.uniform(k1, (2, 4, 16, 16), dtype=jnp.float32)
    img_R = jax.random.uniform(k2, (2, 4, 16, 16), dtype=jnp.float32)

    loss = jax.jit(exclusion_loss)(img_T, img_R)
    jax.block_until_ready(loss)
    print("KERNEL_OK")
</pallas_src>

<mosaic_0001>
module attributes {stable_mosaic.version = 11 : i64} {
  func.func @_exclusion_kernel(%arg0: memref<16x128xf32, #tpu.memory_space<vmem>>, %arg1: memref<16x128xf32, #tpu.memory_space<vmem>>, %arg2: memref<1xf32, #tpu.memory_space<smem>>) attributes {dimension_semantics = [], scalar_prefetch = 0 : i64, scratch_operands = 0 : i64, tpu.core_type = #tpu.core_type<tc>} {
    %c0 = arith.constant 0 : index
    %c0_0 = arith.constant 0 : index
    %0 = vector.load %arg0[%c0, %c0_0] : memref<16x128xf32, #tpu.memory_space<vmem>>, vector<16x128xf32>
    %c0_1 = arith.constant 0 : index
    %c0_2 = arith.constant 0 : index
    %1 = vector.load %arg1[%c0_1, %c0_2] : memref<16x128xf32, #tpu.memory_space<vmem>>, vector<16x128xf32>
    %2 = tpu.iota {dimensions = array<i32: 0>} : vector<16x32xi32>
    %3 = tpu.iota {dimensions = array<i32: 1>} : vector<16x32xi32>
    %c2_i32 = arith.constant 2 : i32
    %4 = vector.broadcast %c2_i32 : i32 to vector<16x32xi32>
    %5 = arith.muli %4, %2 : vector<16x32xi32>
    %6 = arith.cmpi eq, %3, %5 : vector<16x32xi32>
    %c2_i32_3 = arith.constant 2 : i32
    %7 = vector.broadcast %c2_i32_3 : i32 to vector<16x32xi32>
    %8 = arith.muli %7, %2 : vector<16x32xi32>
    %c1_i32 = arith.constant 1 : i32
    %9 = vector.broadcast %c1_i32 : i32 to vector<16x32xi32>
    %10 = arith.addi %8, %9 : vector<16x32xi32>
    %11 = arith.cmpi eq, %3, %10 : vector<16x32xi32>
    %12 = arith.ori %6, %11 : vector<16x32xi1>
    %cst = arith.constant 5.000000e-01 : f32
    %cst_4 = arith.constant 0.000000e+00 : f32
    %13 = vector.broadcast %cst : f32 to vector<16x32xf32>
    %14 = vector.broadcast %cst_4 : f32 to vector<16x32xf32>
    %15 = arith.select %12, %13, %14 : vector<16x32xi1>, vector<16x32xf32>
    %16 = arith.truncf %15 : vector<16x32xf32> to vector<16x32xbf16>
    %17 = tpu.iota {dimensions = array<i32: 0>} : vector<128x64xi32>
    %18 = tpu.iota {dimensions = array<i32: 1>} : vector<128x64xi32>
    %c2_i32_5 = arith.constant 2 : i32
    %19 = vector.broadcast %c2_i32_5 : i32 to vector<128x64xi32>
    %20 = arith.muli %19, %18 : vector<128x64xi32>
    %21 = arith.cmpi eq, %17, %20 : vector<128x64xi32>
    %c2_i32_6 = arith.constant 2 : i32
    %22 = vector.broadcast %c2_i32_6 : i32 to vector<128x64xi32>
    %23 = arith.muli %22, %18 : vector<128x64xi32>
    %c1_i32_7 = arith.constant 1 : i32
    %24 = vector.broadcast %c1_i32_7 : i32 to vector<128x64xi32>
    %25 = arith.addi %23, %24 : vector<128x64xi32>
    %26 = arith.cmpi eq, %17, %25 : vector<128x64xi32>
    %27 = arith.ori %21, %26 : vector<128x64xi1>
    %cst_8 = arith.constant 5.000000e-01 : f32
    %cst_9 = arith.constant 0.000000e+00 : f32
    %28 = vector.broadcast %cst_8 : f32 to vector<128x64xf32>
    %29 = vector.broadcast %cst_9 : f32 to vector<128x64xf32>
    %30 = arith.select %27, %28, %29 : vector<128x64xi1>, vector<128x64xf32>
    %31 = arith.truncf %30 : vector<128x64xf32> to vector<128x64xbf16>
    %32 = vector.extract_strided_slice %0 {offsets = [1, 0], sizes = [15, 128], strides = [1, 1]} : vector<16x128xf32> to vector<15x128xf32>
    %33 = vector.extract_strided_slice %0 {offsets = [0, 0], sizes = [15, 128], strides = [1, 1]} : vector<16x128xf32> to vector<15x128xf32>
    %34 = arith.subf %32, %33 : vector<15x128xf32>
    %35 = vector.extract_strided_slice %1 {offsets = [1, 0], sizes = [15, 128], strides = [1, 1]} : vector<16x128xf32> to vector<15x128xf32>
    %36 = vector.extract_strided_slice %1 {offsets = [0, 0], sizes = [15, 128], strides = [1, 1]} : vector<16x128xf32> to vector<15x128xf32>
    %37 = arith.subf %35, %36 : vector<15x128xf32>
    %38 = tpu.iota {dimensions = array<i32: 1>} : vector<1x127xi32>
    %c15_i32 = arith.constant 15 : i32
    %39 = vector.broadcast %c15_i32 : i32 to vector<1x127xi32>
    %40 = arith.andi %38, %39 : vector<1x127xi32>
    %c15_i32_10 = arith.constant 15 : i32
    %41 = vector.broadcast %c15_i32_10 : i32 to vector<1x127xi32>
    %42 = arith.cmpi ne, %40, %41 : vector<1x127xi32>
    %cst_11 = arith.constant 1.000000e+00 : f32
    %cst_12 = arith.constant 0.000000e+00 : f32
    %43 = vector.broadcast %cst_11 : f32 to vector<1x127xf32>
    %44 = vector.broadcast %cst_12 : f32 to vector<1x127xf32>
    %45 = arith.select %42, %43, %44 : vector<1x127xi1>, vector<1x127xf32>
    %46 = vector.extract_strided_slice %0 {offsets = [0, 1], sizes = [16, 127], strides = [1, 1]} : vector<16x128xf32> to vector<16x127xf32>
    %47 = vector.extract_strided_slice %0 {offsets = [0, 0], sizes = [16, 127], strides = [1, 1]} : vector<16x128xf32> to vector<16x127xf32>
    %48 = arith.subf %46, %47 : vector<16x127xf32>
    %49 = vector.broadcast %45 : vector<1x127xf32> to vector<16x127xf32>
    %50 = arith.mulf %48, %49 : vector<16x127xf32>
    %51 = vector.extract_strided_slice %1 {offsets = [0, 1], sizes = [16, 127], strides = [1, 1]} : vector<16x128xf32> to vector<16x127xf32>
    %52 = vector.extract_strided_slice %1 {offsets = [0, 0], sizes = [16, 127], strides = [1, 1]} : vector<16x128xf32> to vector<16x127xf32>
    %53 = arith.subf %51, %52 : vector<16x127xf32>
    %54 = vector.broadcast %45 : vector<1x127xf32> to vector<16x127xf32>
    %55 = arith.mulf %53, %54 : vector<16x127xf32>
    %56 = math.absf %34 : vector<15x128xf32>
    %57 = vector.shape_cast %56 : vector<15x128xf32> to vector<1x15x128xf32>
    %cst_13 = arith.constant dense<0.000000e+00> : vector<1xf32>
    %58 = vector.multi_reduction <add>, %57, %cst_13 [1, 2] : vector<1x15x128xf32> to vector<1xf32>
    %59 = vector.shape_cast %58 : vector<1xf32> to vector<1x1x1xf32>
    %60 = vector.extract %59[0, 0, 0] : f32 from vector<1x1x1xf32>
    %cst_14 = arith.constant 1.920000e+03 : f32
    %61 = arith.divf %60, %cst_14 : f32
    %62 = math.absf %37 : vector<15x128xf32>
    %63 = vector.shape_cast %62 : vector<15x128xf32> to vector<1x15x128xf32>
    %cst_15 = arith.constant dense<0.000000e+00> : vector<1xf32>
    %64 = vector.multi_reduction <add>, %63, %cst_15 [1, 2] : vector<1x15x128xf32> to vector<1xf32>
    %65 = vector.shape_cast %64 : vector<1xf32> to vector<1x1x1xf32>
    %66 = vector.extract %65[0, 0, 0] : f32 from vector<1x1x1xf32>
    %cst_16 = arith.constant 1.920000e+03 : f32
    %67 = arith.divf %66, %cst_16 : f32
    %68 = math.absf %50 : vector<16x127xf32>
    %69 = vector.shape_cast %68 : vector<16x127xf32> to vector<1x16x127xf32>
    %cst_17 = arith.constant dense<0.000000e+00> : vector<1xf32>
    %70 = vector.multi_reduction <add>, %69, %cst_17 [1, 2] : vector<1x16x127xf32> to vector<1xf32>
    %71 = vector.shape_cast %70 : vector<1xf32> to vector<1x1x1xf32>
    %72 = vector.extract %71[0, 0, 0] : f32 from vector<1x1x1xf32>
    %cst_18 = arith.constant 1.920000e+03 : f32
    %73 = arith.divf %72, %cst_18 : f32
    %74 = math.absf %55 : vector<16x127xf32>
    %75 = vector.shape_cast %74 : vector<16x127xf32> to vector<1x16x127xf32>
    %cst_19 = arith.constant dense<0.000000e+00> : vector<1xf32>
    %76 = vector.multi_reduction <add>, %75, %cst_19 [1, 2] : vector<1x16x127xf32> to vector<1xf32>
    %77 = vector.shape_cast %76 : vector<1xf32> to vector<1x1x1xf32>
    %78 = vector.extract %77[0, 0, 0] : f32 from vector<1x1x1xf32>
    %cst_20 = arith.constant 1.920000e+03 : f32
    %79 = arith.divf %78, %cst_20 : f32
    %cst_21 = arith.constant 2.000000e+00 : f32
    %80 = arith.mulf %cst_21, %61 : f32
    %cst_22 = arith.constant 9.99999997E-7 : f32
    %81 = arith.addf %67, %cst_22 : f32
    %82 = arith.divf %80, %81 : f32
    %cst_23 = arith.constant 2.000000e+00 : f32
    %83 = arith.mulf %cst_23, %73 : f32
    %cst_24 = arith.constant 9.99999997E-7 : f32
    %84 = arith.addf %79, %cst_24 : f32
    %85 = arith.divf %83, %84 : f32
    %cst_25 = arith.constant 5.000000e-01 : f32
    %86 = vector.broadcast %cst_25 : f32 to vector<15x128xf32>
    %87 = arith.mulf %86, %34 : vector<15x128xf32>
    %88 = math.tanh %87 : vector<15x128xf32>
    %cst_26 = arith.constant 5.000000e-01 : f32
    %89 = arith.mulf %cst_26, %82 : f32
    %90 = vector.broadcast %89 : f32 to vector<15x128xf32>
    %91 = arith.mulf %90, %37 : vector<15x128xf32>
    %92 = math.tanh %91 : vector<15x128xf32>
    %93 = arith.mulf %88, %92 : vector<15x128xf32>
    %cst_27 = arith.constant 5.000000e-01 : f32
    %94 = vector.broadcast %cst_27 : f32 to vector<16x127xf32>
    %95 = arith.mulf %94, %50 : vector<16x127xf32>
    %96 = math.tanh %95 : vector<16x127xf32>
    %cst_28 = arith.constant 5.000000e-01 : f32
    %97 = arith.mulf %cst_28, %85 : f32
    %98 = vector.broadcast %97 : f32 to vector<16x127xf32>
    %99 = arith.mulf %98, %55 : vector<16x127xf32>
    %100 = math.tanh %99 : vector<16x127xf32>
    %101 = arith.mulf %96, %100 : vector<16x127xf32>
    %102 = arith.mulf %93, %93 : vector<15x128xf32>
    %103 = vector.shape_cast %102 : vector<15x128xf32> to vector<1x15x128xf32>
    %cst_29 = arith.constant dense<0.000000e+00> : vector<1xf32>
    %104 = vector.multi_reduction <add>, %103, %cst_29 [1, 2] : vector<1x15x128xf32> to vector<1xf32>
    %105 = vector.shape_cast %104 : vector<1xf32> to vector<1x1x1xf32>
    %106 = vector.extract %105[0, 0, 0] : f32 from vector<1x1x1xf32>
    %cst_30 = arith.constant 1.920000e+03 : f32
    %107 = arith.divf %106, %cst_30 : f32
    %108 = arith.mulf %101, %101 : vector<16x127xf32>
    %109 = vector.shape_cast %108 : vector<16x127xf32> to vector<1x16x127xf32>
    %cst_31 = arith.constant dense<0.000000e+00> : vector<1xf32>
    %110 = vector.multi_reduction <add>, %109, %cst_31 [1, 2] : vector<1x16x127xf32> to vector<1xf32>
    %111 = vector.shape_cast %110 : vector<1xf32> to vector<1x1x1xf32>
    %112 = vector.extract %111[0, 0, 0] : f32 from vector<1x1x1xf32>
    %cst_32 = arith.constant 1.920000e+03 : f32
    %113 = arith.divf %112, %cst_32 : f32
    %cst_33 = arith.constant 9.99999997E-7 : f32
    %114 = arith.addf %107, %cst_33 : f32
    %115 = math.sqrt %114 : f32
    %116 = math.sqrt %115 : f32
    %cst_34 = arith.constant 0.000000e+00 : f32
    %117 = arith.addf %cst_34, %116 : f32
    %cst_35 = arith.constant 9.99999997E-7 : f32
    %118 = arith.addf %113, %cst_35 : f32
    %119 = math.sqrt %118 : f32
    %120 = math.sqrt %119 : f32
    %cst_36 = arith.constant 0.000000e+00 : f32
    %121 = arith.addf %cst_36, %120 : f32
    %122 = tpu.concatenate %0, %1 in 0 : vector<16x128xf32>, vector<16x128xf32> -> vector<32x128xf32>
    %123 = arith.truncf %122 : vector<32x128xf32> to vector<32x128xbf16>
    %cst_37 = arith.constant dense<0.000000e+00> : vector<16x128xf32>
    %124 = tpu.matmul %16, %123, %cst_37 {dimension_numbers = #tpu.dot_dimension_numbers<[1], [0], [0], [1], [0, 0, 1, 1], [], []>} : vector<16x32xbf16>, vector<32x128xbf16>, vector<16x128xf32> -> vector<16x128xf32>
    %125 = arith.truncf %124 : vector<16x128xf32> to vector<16x128xbf16>
    %cst_38 = arith.constant dense<0.000000e+00> : vector<16x64xf32>
    %126 = tpu.matmul %125, %31, %cst_38 {dimension_numbers = #tpu.dot_dimension_numbers<[1], [0], [0], [1], [0, 0, 1, 1], [], []>} : vector<16x128xbf16>, vector<128x64xbf16>, vector<16x64xf32> -> vector<16x64xf32>
    %127 = vector.extract_strided_slice %126 {offsets = [0, 0], sizes = [8, 64], strides = [1, 1]} : vector<16x64xf32> to vector<8x64xf32>
    %128 = vector.extract_strided_slice %126 {offsets = [8, 0], sizes = [8, 64], strides = [1, 1]} : vector<16x64xf32> to vector<8x64xf32>
    %129 = vector.extract_strided_slice %127 {offsets = [1, 0], sizes = [7, 64], strides = [1, 1]} : vector<8x64xf32> to vector<7x64xf32>
    %130 = vector.extract_strided_slice %127 {offsets = [0, 0], sizes = [7, 64], strides = [1, 1]} : vector<8x64xf32> to vector<7x64xf32>
    %131 = arith.subf %129, %130 : vector<7x64xf32>
    %132 = vector.extract_strided_slice %128 {offsets = [1, 0], sizes = [7, 64], strides = [1, 1]} : vector<8x64xf32> to vector<7x64xf32>
    %133 = vector.extract_strided_slice %128 {offsets = [0, 0], sizes = [7, 64], strides = [1, 1]} : vector<8x64xf32> to vector<7x64xf32>
    %134 = arith.subf %132, %133 : vector<7x64xf32>
    %135 = tpu.iota {dimensions = array<i32: 1>} : vector<1x63xi32>
    %c7_i32 = arith.constant 7 : i32
    %136 = vector.broadcast %c7_i32 : i32 to vector<1x63xi32>
    %137 = arith.andi %135, %136 : vector<1x63xi32>
    %c7_i32_39 = arith.constant 7 : i32
    %138 = vector.broadcast %c7_i32_39 : i32 to vector<1x63xi32>
    %139 = arith.cmpi ne, %137, %138 : vector<1x63xi32>
    %cst_40 = arith.constant 1.000000e+00 : f32
    %cst_41 = arith.constant 0.000000e+00 : f32
    %140 = vector.broadcast %cst_40 : f32 to vector<1x63xf32>
    %141 = vector.broadcast %cst_41 : f32 to vector<1x63xf32>
    %142 = arith.select %139, %140, %141 : vector<1x63xi1>, vector<1x63xf32>
    %143 = vector.extract_strided_slice %127 {offsets = [0, 1], sizes = [8, 63], strides = [1, 1]} : vector<8x64xf32> to vector<8x63xf32>
    %144 = vector.extract_strided_slice %127 {offsets = [0, 0], sizes = [8, 63], strides = [1, 1]} : vector<8x64xf32> to vector<8x63xf32>
    %145 = arith.subf %143, %144 : vector<8x63xf32>
    %146 = vector.broadcast %142 : vector<1x63xf32> to vector<8x63xf32>
    %147 = arith.mulf %145, %146 : vector<8x63xf32>
    %148 = vector.extract_strided_slice %128 {offsets = [0, 1], sizes = [8, 63], strides = [1, 1]} : vector<8x64xf32> to vector<8x63xf32>
    %149 = vector.extract_strided_slice %128 {offsets = [0, 0], sizes = [8, 63], strides = [1, 1]} : vector<8x64xf32> to vector<8x63xf32>
    %150 = arith.subf %148, %149 : vector<8x63xf32>
    %151 = vector.broadcast %142 : vector<1x63xf32> to vector<8x63xf32>
    %152 = arith.mulf %150, %151 : vector<8x63xf32>
    %153 = math.absf %131 : vector<7x64xf32>
    %154 = vector.shape_cast %153 : vector<7x64xf32> to vector<1x7x64xf32>
    %cst_42 = arith.constant dense<0.000000e+00> : vector<1xf32>
    %155 = vector.multi_reduction <add>, %154, %cst_42 [1, 2] : vector<1x7x64xf32> to vector<1xf32>
    %156 = vector.shape_cast %155 : vector<1xf32> to vector<1x1x1xf32>
    %157 = vector.extract %156[0, 0, 0] : f32 from vector<1x1x1xf32>
    %cst_43 = arith.constant 4.480000e+02 : f32
    %158 = arith.divf %157, %cst_43 : f32
    %159 = math.absf %134 : vector<7x64xf32>
    %160 = vector.shape_cast %159 : vector<7x64xf32> to vector<1x7x64xf32>
    %cst_44 = arith.constant dense<0.000000e+00> : vector<1xf32>
    %161 = vector.multi_reduction <add>, %160, %cst_44 [1, 2] : vector<1x7x64xf32> to vector<1xf32>
    %162 = vector.shape_cast %161 : vector<1xf32> to vector<1x1x1xf32>
    %163 = vector.extract %162[0, 0, 0] : f32 from vector<1x1x1xf32>
    %cst_45 = arith.constant 4.480000e+02 : f32
    %164 = arith.divf %163, %cst_45 : f32
    %165 = math.absf %147 : vector<8x63xf32>
    %166 = vector.shape_cast %165 : vector<8x63xf32> to vector<1x8x63xf32>
    %cst_46 = arith.constant dense<0.000000e+00> : vector<1xf32>
    %167 = vector.multi_reduction <add>, %166, %cst_46 [1, 2] : vector<1x8x63xf32> to vector<1xf32>
    %168 = vector.shape_cast %167 : vector<1xf32> to vector<1x1x1xf32>
    %169 = vector.extract %168[0, 0, 0] : f32 from vector<1x1x1xf32>
    %cst_47 = arith.constant 4.480000e+02 : f32
    %170 = arith.divf %169, %cst_47 : f32
    %171 = math.absf %152 : vector<8x63xf32>
    %172 = vector.shape_cast %171 : vector<8x63xf32> to vector<1x8x63xf32>
    %cst_48 = arith.constant dense<0.000000e+00> : vector<1xf32>
    %173 = vector.multi_reduction <add>, %172, %cst_48 [1, 2] : vector<1x8x63xf32> to vector<1xf32>
    %174 = vector.shape_cast %173 : vector<1xf32> to vector<1x1x1xf32>
    %175 = vector.extract %174[0, 0, 0] : f32 from vector<1x1x1xf32>
    %cst_49 = arith.constant 4.480000e+02 : f32
    %176 = arith.divf %175, %cst_49 : f32
    %cst_50 = arith.constant 2.000000e+00 : f32
    %177 = arith.mulf %cst_50, %158 : f32
    %cst_51 = arith.constant 9.99999997E-7 : f32
    %178 = arith.addf %164, %cst_51 : f32
    %179 = arith.divf %177, %178 : f32
    %cst_52 = arith.constant 2.000000e+00 : f32
    %180 = arith.mulf %cst_52, %170 : f32
    %cst_53 = arith.constant 9.99999997E-7 : f32
    %181 = arith.addf %176, %cst_53 : f32
    %182 = arith.divf %180, %181 : f32
    %cst_54 = arith.constant 5.000000e-01 : f32
    %183 = vector.broadcast %cst_54 : f32 to vector<7x64xf32>
    %184 = arith.mulf %183, %131 : vector<7x64xf32>
    %185 = math.tanh %184 : vector<7x64xf32>
    %cst_55 = arith.constant 5.000000e-01 : f32
    %186 = arith.mulf %cst_55, %179 : f32
    %187 = vector.broadcast %186 : f32 to vector<7x64xf32>
    %188 = arith.mulf %187, %134 : vector<7x64xf32>
    %189 = math.tanh %188 : vector<7x64xf32>
    %190 = arith.mulf %185, %189 : vector<7x64xf32>
    %cst_56 = arith.constant 5.000000e-01 : f32
    %191 = vector.broadcast %cst_56 : f32 to vector<8x63xf32>
    %192 = arith.mulf %191, %147 : vector<8x63xf32>
    %193 = math.tanh %192 : vector<8x63xf32>
    %cst_57 = arith.constant 5.000000e-01 : f32
    %194 = arith.mulf %cst_57, %182 : f32
    %195 = vector.broadcast %194 : f32 to vector<8x63xf32>
    %196 = arith.mulf %195, %152 : vector<8x63xf32>
    %197 = math.tanh %196 : vector<8x63xf32>
    %198 = arith.mulf %193, %197 : vector<8x63xf32>
    %199 = arith.mulf %190, %190 : vector<7x64xf32>
    %200 = vector.shape_cast %199 : vector<7x64xf32> to vector<1x7x64xf32>
    %cst_58 = arith.constant dense<0.000000e+00> : vector<1xf32>
    %201 = vector.multi_reduction <add>, %200, %cst_58 [1, 2] : vector<1x7x64xf32> to vector<1xf32>
    %202 = vector.shape_cast %201 : vector<1xf32> to vector<1x1x1xf32>
    %203 = vector.extract %202[0, 0, 0] : f32 from vector<1x1x1xf32>
    %cst_59 = arith.constant 4.480000e+02 : f32
    %204 = arith.divf %203, %cst_59 : f32
    %205 = arith.mulf %198, %198 : vector<8x63xf32>
    %206 = vector.shape_cast %205 : vector<8x63xf32> to vector<1x8x63xf32>
    %cst_60 = arith.constant dense<0.000000e+00> : vector<1xf32>
    %207 = vector.multi_reduction <add>, %206, %cst_60 [1, 2] : vector<1x8x63xf32> to vector<1xf32>
    %208 = vector.shape_cast %207 : vector<1xf32> to vector<1x1x1xf32>
    %209 = vector.extract %208[0, 0, 0] : f32 from vector<1x1x1xf32>
    %cst_61 = arith.constant 4.480000e+02 : f32
    %210 = arith.divf %209, %cst_61 : f32
    %cst_62 = arith.constant 9.99999997E-7 : f32
    %211 = arith.addf %204, %cst_62 : f32
    %212 = math.sqrt %211 : f32
    %213 = math.sqrt %212 : f32
    %214 = arith.addf %117, %213 : f32
    %cst_63 = arith.constant 9.99999997E-7 : f32
    %215 = arith.addf %210, %cst_63 : f32
    %216 = math.sqrt %215 : f32
    %217 = math.sqrt %216 : f32
    %218 = arith.addf %121, %217 : f32
    %219 = tpu.concatenate %127, %128 in 0 : vector<8x64xf32>, vector<8x64xf32> -> vector<16x64xf32>
    %220 = arith.truncf %219 : vector<16x64xf32> to vector<16x64xbf16>
    %221 = vector.extract_strided_slice %16 {offsets = [0, 0], sizes = [8, 16], strides = [1, 1]} : vector<16x32xbf16> to vector<8x16xbf16>
    %222 = vector.extract_strided_slice %31 {offsets = [0, 0], sizes = [64, 32], strides = [1, 1]} : vector<128x64xbf16> to vector<64x32xbf16>
    %cst_64 = arith.constant dense<0.000000e+00> : vector<8x64xf32>
    %223 = tpu.matmul %221, %220, %cst_64 {dimension_numbers = #tpu.dot_dimension_numbers<[1], [0], [0], [1], [0, 0, 1, 1], [], []>} : vector<8x16xbf16>, vector<16x64xbf16>, vector<8x64xf32> -> vector<8x64xf32>
    %224 = arith.truncf %223 : vector<8x64xf32> to vector<8x64xbf16>
    %cst_65 = arith.constant dense<0.000000e+00> : vector<8x32xf32>
    %225 = tpu.matmul %224, %222, %cst_65 {dimension_numbers = #tpu.dot_dimension_numbers<[1], [0], [0], [1], [0, 0, 1, 1], [], []>} : vector<8x64xbf16>, vector<64x32xbf16>, vector<8x32xf32> -> vector<8x32xf32>
    %226 = vector.extract_strided_slice %225 {offsets = [0, 0], sizes = [4, 32], strides = [1, 1]} : vector<8x32xf32> to vector<4x32xf32>
    %227 = vector.extract_strided_slice %225 {offsets = [4, 0], sizes = [4, 32], strides = [1, 1]} : vector<8x32xf32> to vector<4x32xf32>
    %228 = vector.extract_strided_slice %226 {offsets = [1, 0], sizes = [3, 32], strides = [1, 1]} : vector<4x32xf32> to vector<3x32xf32>
    %229 = vector.extract_strided_slice %226 {offsets = [0, 0], sizes = [3, 32], strides = [1, 1]} : vector<4x32xf32> to vector<3x32xf32>
    %230 = arith.subf %228, %229 : vector<3x32xf32>
    %231 = vector.extract_strided_slice %227 {offsets = [1, 0], sizes = [3, 32], strides = [1, 1]} : vector<4x32xf32> to vector<3x32xf32>
    %232 = vector.extract_strided_slice %227 {offsets = [0, 0], sizes = [3, 32], strides = [1, 1]} : vector<4x32xf32> to vector<3x32xf32>
    %233 = arith.subf %231, %232 : vector<3x32xf32>
    %234 = tpu.iota {dimensions = array<i32: 1>} : vector<1x31xi32>
    %c3_i32 = arith.constant 3 : i32
    %235 = vector.broadcast %c3_i32 : i32 to vector<1x31xi32>
    %236 = arith.andi %234, %235 : vector<1x31xi32>
    %c3_i32_66 = arith.constant 3 : i32
    %237 = vector.broadcast %c3_i32_66 : i32 to vector<1x31xi32>
    %238 = arith.cmpi ne, %236, %237 : vector<1x31xi32>
    %cst_67 = arith.constant 1.000000e+00 : f32
    %cst_68 = arith.constant 0.000000e+00 : f32
    %239 = vector.broadcast %cst_67 : f32 to vector<1x31xf32>
    %240 = vector.broadcast %cst_68 : f32 to vector<1x31xf32>
    %241 = arith.select %238, %239, %240 : vector<1x31xi1>, vector<1x31xf32>
    %242 = vector.extract_strided_slice %226 {offsets = [0, 1], sizes = [4, 31], strides = [1, 1]} : vector<4x32xf32> to vector<4x31xf32>
    %243 = vector.extract_strided_slice %226 {offsets = [0, 0], sizes = [4, 31], strides = [1, 1]} : vector<4x32xf32> to vector<4x31xf32>
    %244 = arith.subf %242, %243 : vector<4x31xf32>
    %245 = vector.broadcast %241 : vector<1x31xf32> to vector<4x31xf32>
    %246 = arith.mulf %244, %245 : vector<4x31xf32>
    %247 = vector.extract_strided_slice %227 {offsets = [0, 1], sizes = [4, 31], strides = [1, 1]} : vector<4x32xf32> to vector<4x31xf32>
    %248 = vector.extract_strided_slice %227 {offsets = [0, 0], sizes = [4, 31], strides = [1, 1]} : vector<4x32xf32> to vector<4x31xf32>
    %249 = arith.subf %247, %248 : vector<4x31xf32>
    %250 = vector.broadcast %241 : vector<1x31xf32> to vector<4x31xf32>
    %251 = arith.mulf %249, %250 : vector<4x31xf32>
    %252 = math.absf %230 : vector<3x32xf32>
    %253 = vector.shape_cast %252 : vector<3x32xf32> to vector<1x3x32xf32>
    %cst_69 = arith.constant dense<0.000000e+00> : vector<1xf32>
    %254 = vector.multi_reduction <add>, %253, %cst_69 [1, 2] : vector<1x3x32xf32> to vector<1xf32>
    %255 = vector.shape_cast %254 : vector<1xf32> to vector<1x1x1xf32>
    %256 = vector.extract %255[0, 0, 0] : f32 from vector<1x1x1xf32>
    %cst_70 = arith.constant 9.600000e+01 : f32
    %257 = arith.divf %256, %cst_70 : f32
    %258 = math.absf %233 : vector<3x32xf32>
    %259 = vector.shape_cast %258 : vector<3x32xf32> to vector<1x3x32xf32>
    %cst_71 = arith.constant dense<0.000000e+00> : vector<1xf32>
    %260 = vector.multi_reduction <add>, %259, %cst_71 [1, 2] : vector<1x3x32xf32> to vector<1xf32>
    %261 = vector.shape_cast %260 : vector<1xf32> to vector<1x1x1xf32>
    %262 = vector.extract %261[0, 0, 0] : f32 from vector<1x1x1xf32>
    %cst_72 = arith.constant 9.600000e+01 : f32
    %263 = arith.divf %262, %cst_72 : f32
    %264 = math.absf %246 : vector<4x31xf32>
    %265 = vector.shape_cast %264 : vector<4x31xf32> to vector<1x4x31xf32>
    %cst_73 = arith.constant dense<0.000000e+00> : vector<1xf32>
    %266 = vector.multi_reduction <add>, %265, %cst_73 [1, 2] : vector<1x4x31xf32> to vector<1xf32>
    %267 = vector.shape_cast %266 : vector<1xf32> to vector<1x1x1xf32>
    %268 = vector.extract %267[0, 0, 0] : f32 from vector<1x1x1xf32>
    %cst_74 = arith.constant 9.600000e+01 : f32
    %269 = arith.divf %268, %cst_74 : f32
    %270 = math.absf %251 : vector<4x31xf32>
    %271 = vector.shape_cast %270 : vector<4x31xf32> to vector<1x4x31xf32>
    %cst_75 = arith.constant dense<0.000000e+00> : vector<1xf32>
    %272 = vector.multi_reduction <add>, %271, %cst_75 [1, 2] : vector<1x4x31xf32> to vector<1xf32>
    %273 = vector.shape_cast %272 : vector<1xf32> to vector<1x1x1xf32>
    %274 = vector.extract %273[0, 0, 0] : f32 from vector<1x1x1xf32>
    %cst_76 = arith.constant 9.600000e+01 : f32
    %275 = arith.divf %274, %cst_76 : f32
    %cst_77 = arith.constant 2.000000e+00 : f32
    %276 = arith.mulf %cst_77, %257 : f32
    %cst_78 = arith.constant 9.99999997E-7 : f32
    %277 = arith.addf %263, %cst_78 : f32
    %278 = arith.divf %276, %277 : f32
    %cst_79 = arith.constant 2.000000e+00 : f32
    %279 = arith.mulf %cst_79, %269 : f32
    %cst_80 = arith.constant 9.99999997E-7 : f32
    %280 = arith.addf %275, %cst_80 : f32
    %281 = arith.divf %279, %280 : f32
    %cst_81 = arith.constant 5.000000e-01 : f32
    %282 = vector.broadcast %cst_81 : f32 to vector<3x32xf32>
    %283 = arith.mulf %282, %230 : vector<3x32xf32>
    %284 = math.tanh %283 : vector<3x32xf32>
    %cst_82 = arith.constant 5.000000e-01 : f32
    %285 = arith.mulf %cst_82, %278 : f32
    %286 = vector.broadcast %285 : f32 to vector<3x32xf32>
    %287 = arith.mulf %286, %233 : vector<3x32xf32>
    %288 = math.tanh %287 : vector<3x32xf32>
    %289 = arith.mulf %284, %288 : vector<3x32xf32>
    %cst_83 = arith.constant 5.000000e-01 : f32
    %290 = vector.broadcast %cst_83 : f32 to vector<4x31xf32>
    %291 = arith.mulf %290, %246 : vector<4x31xf32>
    %292 = math.tanh %291 : vector<4x31xf32>
    %cst_84 = arith.constant 5.000000e-01 : f32
    %293 = arith.mulf %cst_84, %281 : f32
    %294 = vector.broadcast %293 : f32 to vector<4x31xf32>
    %295 = arith.mulf %294, %251 : vector<4x31xf32>
    %296 = math.tanh %295 : vector<4x31xf32>
    %297 = arith.mulf %292, %296 : vector<4x31xf32>
    %298 = arith.mulf %289, %289 : vector<3x32xf32>
    %299 = vector.shape_cast %298 : vector<3x32xf32> to vector<1x3x32xf32>
    %cst_85 = arith.constant dense<0.000000e+00> : vector<1xf32>
    %300 = vector.multi_reduction <add>, %299, %cst_85 [1, 2] : vector<1x3x32xf32> to vector<1xf32>
    %301 = vector.shape_cast %300 : vector<1xf32> to vector<1x1x1xf32>
    %302 = vector.extract %301[0, 0, 0] : f32 from vector<1x1x1xf32>
    %cst_86 = arith.constant 9.600000e+01 : f32
    %303 = arith.divf %302, %cst_86 : f32
    %304 = arith.mulf %297, %297 : vector<4x31xf32>
    %305 = vector.shape_cast %304 : vector<4x31xf32> to vector<1x4x31xf32>
    %cst_87 = arith.constant dense<0.000000e+00> : vector<1xf32>
    %306 = vector.multi_reduction <add>, %305, %cst_87 [1, 2] : vector<1x4x31xf32> to vector<1xf32>
    %307 = vector.shape_cast %306 : vector<1xf32> to vector<1x1x1xf32>
    %308 = vector.extract %307[0, 0, 0] : f32 from vector<1x1x1xf32>
    %cst_88 = arith.constant 9.600000e+01 : f32
    %309 = arith.divf %308, %cst_88 : f32
    %cst_89 = arith.constant 9.99999997E-7 : f32
    %310 = arith.addf %303, %cst_89 : f32
    %311 = math.sqrt %310 : f32
    %312 = math.sqrt %311 : f32
    %313 = arith.addf %214, %312 : f32
    %cst_90 = arith.constant 9.99999997E-7 : f32
    %314 = arith.addf %309, %cst_90 : f32
    %315 = math.sqrt %314 : f32
    %316 = math.sqrt %315 : f32
    %317 = arith.addf %218, %316 : f32
    %cst_91 = arith.constant 3.000000e+00 : f32
    %318 = arith.divf %313, %cst_91 : f32
    %cst_92 = arith.constant 3.000000e+00 : f32
    %319 = arith.divf %317, %cst_92 : f32
    %320 = arith.addf %318, %319 : f32
    %cst_93 = arith.constant 5.000000e-01 : f32
    %321 = arith.mulf %320, %cst_93 : f32
    %c0_94 = arith.constant 0 : index
    %322 = memref.load %arg2[%c0_94] : memref<1xf32, #tpu.memory_space<smem>>
    memref.store %321, %arg2[%c0_94] : memref<1xf32, #tpu.memory_space<smem>>
    return
  }
}

</mosaic_0001>

<llo_original>
// kernel: exclusion_loss.1
$region0: #{exclusion_loss.1}
  #allocation0 [shape = 'u32[]', space=smem, size = 0x4, offset = 0x4, fixed_abs, tag = 'smem constant byte address 0x4 - core index']
  #allocation1 [shape = 'u32[72,128]{1,0:T(1,128)}', space=vmem, size = 0x9000, scoped, tag = 'internal scratch']
  %s0 = inlined_call_operand.vmem [shape: f32[16,128], index: 0, kind: input, shape index: {}]
  %s1 = inlined_call_operand.vmem [shape: f32[16,128], index: 1, kind: input, shape index: {}]
  %s2 = inlined_call_operand.hbm [shape: f32[1], index: 2, kind: output, shape index: {}]
  %s3 = sld [smem:[#allocation0]]
  $region18: #{exclusion_loss.1} parent=0
    _
  %s5 = ssub.s32 1, %s3
  %s6 = scalar_select 0, %s5, %s3
  $region1: #{exclusion_loss.1} parent=0
    #allocation2 [shape = 'u8[512]{0}', space=smem, size = 0x200, scoped, tag = 'output window, operand 0, single buffered']
    #allocation3 [shape = 's32[1]{0}', space=sflag, size = 0x4, scoped, tag = 'scoped memory for exclusion_loss.1']
    %7 = vsyncpa [#allocation3], 0
    // Predicated region
    $region2: #{exclusion_loss.1} parent=1 // pred_check
      _
    $region3: #{exclusion_loss.1} parent=1 // pred_check_branch
      %9 = sbr.rel (0) target = $region5
    $region4: #{exclusion_loss.1} parent=1 // pred_region
      _
    $region5: #{exclusion_loss.1} parent=1 // pred_fallthru
      _
    // Predicated region
    $region6: #{exclusion_loss.1} parent=1 // pred_check
      _
    $region7: #{exclusion_loss.1} parent=1 // pred_check_branch
      %11 = sbr.rel (0) target = $region9
    $region8: #{exclusion_loss.1} parent=1 // pred_region
      _
    $region9: #{exclusion_loss.1} parent=1 // pred_fallthru
      _
    %v13 = vld [vmem:[%s0] sm:$0xff]
    %v14 = vld [vmem:[%s0 + $0x8] sm:$0xff]
    %v15 = vld [vmem:[%s1] sm:$0xff]
    %v16 = vld [vmem:[%s1 + $0x8] sm:$0xff]
    %v17 = vlaneseq
    %v18 = vshrl.u32 %v17, 7
    %v19 = vadd.s32 %v18, 8
    %v20 = vlaneseq
    %v21 = vand.u32 %v20, 127
    %v22 = vmul.u32 %v18, 2
    %v23 = vmul.u32 %v19, 2
    %vm24 = vcmp.eq.s32.totalorder %v21, %v22
    %vm25 = vcmp.eq.s32.totalorder %v21, %v23
    %v26 = vadd.s32 %v22, 1
    %v27 = vadd.s32 %v23, 1
    %vm28 = vcmp.eq.s32.totalorder %v21, %v26
    %vm29 = vcmp.eq.s32.totalorder %v21, %v27
    %vm30 = vmor %vm24, %vm28
    %vm31 = vmor %vm25, %vm29
    %v32 = vsel %vm30, 0.5, 0.0
    %v33 = vsel %vm31, 0.5, 0.0
    %v34 = vpack.c.bf16 %v32, %v32
    %v35 = vpack.c.bf16 %v33, %v33
    %v36 = vadd.s32 %v18, 16
    %v37 = vadd.s32 %v18, 24
    %v38 = vadd.s32 %v18, 32
    %v39 = vadd.s32 %v18, 40
    %v40 = vadd.s32 %v18, 48
    %v41 = vadd.s32 %v18, 56
    %v42 = vadd.s32 %v18, 64
    %v43 = vadd.s32 %v18, 72
    %v44 = vadd.s32 %v18, 80
    %v45 = vadd.s32 %v18, 88
    %v46 = vadd.s32 %v18, 96
    %v47 = vadd.s32 %v18, 104
    %v48 = vadd.s32 %v18, 112
    %v49 = vadd.s32 %v18, 120
    %v50 = vmul.u32 %v21, 2
    %vm51 = vcmp.eq.s32.totalorder %v18, %v50
    %vm52 = vcmp.eq.s32.totalorder %v19, %v50
    %vm53 = vcmp.eq.s32.totalorder %v36, %v50
    %vm54 = vcmp.eq.s32.totalorder %v37, %v50
    %vm55 = vcmp.eq.s32.totalorder %v38, %v50
    %vm56 = vcmp.eq.s32.totalorder %v39, %v50
    %vm57 = vcmp.eq.s32.totalorder %v40, %v50
    %vm58 = vcmp.eq.s32.totalorder %v41, %v50
    %vm59 = vcmp.eq.s32.totalorder %v42, %v50
    %vm60 = vcmp.eq.s32.totalorder %v43, %v50
    %vm61 = vcmp.eq.s32.totalorder %v44, %v50
    %vm62 = vcmp.eq.s32.totalorder %v45, %v50
    %vm63 = vcmp.eq.s32.totalorder %v46, %v50
    %vm64 = vcmp.eq.s32.totalorder %v47, %v50
    %vm65 = vcmp.eq.s32.totalorder %v48, %v50
    %vm66 = vcmp.eq.s32.totalorder %v49, %v50
    %v67 = vadd.s32 %v50, 1
    %vm68 = vcmp.eq.s32.totalorder %v18, %v67
    %vm69 = vcmp.eq.s32.totalorder %v19, %v67
    %vm70 = vcmp.eq.s32.totalorder %v36, %v67
    %vm71 = vcmp.eq.s32.totalorder %v37, %v67
    %vm72 = vcmp.eq.s32.totalorder %v38, %v67
    %vm73 = vcmp.eq.s32.totalorder %v39, %v67
    %vm74 = vcmp.eq.s32.totalorder %v40, %v67
    %vm75 = vcmp.eq.s32.totalorder %v41, %v67
    %vm76 = vcmp.eq.s32.totalorder %v42, %v67
    %vm77 = vcmp.eq.s32.totalorder %v43, %v67
    %vm78 = vcmp.eq.s32.totalorder %v44, %v67
    %vm79 = vcmp.eq.s32.totalorder %v45, %v67
    %vm80 = vcmp.eq.s32.totalorder %v46, %v67
    %vm81 = vcmp.eq.s32.totalorder %v47, %v67
    %vm82 = vcmp.eq.s32.totalorder %v48, %v67
    %vm83 = vcmp.eq.s32.totalorder %v49, %v67
    %vm84 = vmor %vm51, %vm68
    %vm85 = vmor %vm52, %vm69
    %vm86 = vmor %vm53, %vm70
    %vm87 = vmor %vm54, %vm71
    %vm88 = vmor %vm55, %vm72
    %vm89 = vmor %vm56, %vm73
    %vm90 = vmor %vm57, %vm74
    %vm91 = vmor %vm58, %vm75
    %vm92 = vmor %vm59, %vm76
    %vm93 = vmor %vm60, %vm77
    %vm94 = vmor %vm61, %vm78
    %vm95 = vmor %vm62, %vm79
    %vm96 = vmor %vm63, %vm80
    %vm97 = vmor %vm64, %vm81
    %vm98 = vmor %vm65, %vm82
    %vm99 = vmor %vm66, %vm83
    %v100 = vsel %vm84, 0.5, 0.0
    %v101 = vsel %vm85, 0.5, 0.0
    %v102 = vsel %vm86, 0.5, 0.0
    %v103 = vsel %vm87, 0.5, 0.0
    %v104 = vsel %vm88, 0.5, 0.0
    %v105 = vsel %vm89, 0.5, 0.0
    %v106 = vsel %vm90, 0.5, 0.0
    %v107 = vsel %vm91, 0.5, 0.0
    %v108 = vsel %vm92, 0.5, 0.0
    %v109 = vsel %vm93, 0.5, 0.0
    %v110 = vsel %vm94, 0.5, 0.0
    %v111 = vsel %vm95, 0.5, 0.0
    %v112 = vsel %vm96, 0.5, 0.0
    %v113 = vsel %vm97, 0.5, 0.0
    %v114 = vsel %vm98, 0.5, 0.0
    %v115 = vsel %vm99, 0.5, 0.0
    %v116 = vpack.c.bf16 %v100, %v100
    %v117 = vpack.c.bf16 %v101, %v101
    %v118 = vpack.c.bf16 %v102, %v102
    %v119 = vpack.c.bf16 %v103, %v103
    %v120 = vpack.c.bf16 %v104, %v104
    %v121 = vpack.c.bf16 %v105, %v105
    %v122 = vpack.c.bf16 %v106, %v106
    %v123 = vpack.c.bf16 %v107, %v107
    %v124 = vpack.c.bf16 %v108, %v108
    %v125 = vpack.c.bf16 %v109, %v109
    %v126 = vpack.c.bf16 %v110, %v110
    %v127 = vpack.c.bf16 %v111, %v111
    %v128 = vpack.c.bf16 %v112, %v112
    %v129 = vpack.c.bf16 %v113, %v113
    %v130 = vpack.c.bf16 %v114, %v114
    %v131 = vpack.c.bf16 %v115, %v115
    %vm134 = vcmask 1040384
    %v135 = vrot.slane %v13, 7
    %v136 = vrot.slane %v14, 7
    %v137 = vsel %vm134, %v135, %v136
    %v140 = vsub.f32 %v13, %v135
    %v141 = vsub.f32 %v14, %v137
    %v144 = vrot.slane %v15, 7
    %v145 = vrot.slane %v16, 7
    %v146 = vsel %vm134, %v144, %v145
    %v149 = vsub.f32 %v15, %v144
    %v150 = vsub.f32 %v16, %v146
    %v151 = vand.u32 %v21, 15
    %vm152 = vcmp.ne.s32.totalorder %v151, 15
    %v153 = vsel %vm152, 1.0, 0.0
    %154 = vrot.lane.b32.xlu0 %v13, 1
    %v155 = vpop.permute.xlu0 %154
    %156 = vrot.lane.b32.xlu0 %v14, 1
    %v157 = vpop.permute.xlu0 %156
    %v160 = vsub.f32 %v13, %v155
    %v161 = vsub.f32 %v14, %v157
    %163 = vrot.lane.b32.xlu0 %v153, 1
    %v164 = vpop.permute.xlu0 %163
    %v166 = vmul.f32 %v160, %v164
    %v167 = vmul.f32 %v161, %v164
    %168 = vrot.lane.b32.xlu0 %v15, 1
    %v169 = vpop.permute.xlu0 %168
    %170 = vrot.lane.b32.xlu0 %v16, 1
    %v171 = vpop.permute.xlu0 %170
    %v174 = vsub.f32 %v15, %v169
    %v175 = vsub.f32 %v16, %v171
    %v176 = vmul.f32 %v174, %v164
    %v177 = vmul.f32 %v175, %v164
    %v178 = vand.u32 2147483647, %v140
    %v179 = vand.u32 2147483647, %v141
    %vm182 = vcmask 1046528
    %v183 = vrot.slane %v178, 1
    %v184 = vrot.slane %v179, 1
    %v185 = vsel %vm182, %v183, %v184
    %v188 = vsel %vm182, %v184, 0.0
    %v189 = vadd.f32 %v185, %v188
    %190 = vadd.xlane.f32.xlu0 %v189
    %v191 = vpop.xlane.xlu0 %190
    %v192 = vrot.slane %v191, 4
    %v193 = vadd.f32 %v191, %v192
    %v194 = vrot.slane %v193, 2
    %v195 = vadd.f32 %v193, %v194
    %v196 = vrot.slane %v195, 1
    %v197 = vadd.f32 %v195, %v196
    %s198 = vtos %v197
    %v199 = vrcp.pop 1920.0
    %v200 = vmul.f32 1920.0, %v199
    %v201 = vsub.f32 1.0, %v200
    %v202 = vmul.f32 %v199, %v201
    %v203 = vadd.f32 %v199, %v202
    %vm204 = vweird.f32 %v199
    %v205 = vsel %vm204, %v199, %v203
    %s206 = vtos %v205
    %s207 = smul.f32 %s198, %s206
    %v208 = vand.u32 2147483647, %v149
    %v209 = vand.u32 2147483647, %v150
    %v212 = vrot.slane %v208, 1
    %v213 = vrot.slane %v209, 1
    %v214 = vsel %vm182, %v212, %v213
    %v217 = vsel %vm182, %v213, 0.0
    %v218 = vadd.f32 %v214, %v217
    %219 = vadd.xlane.f32.xlu0 %v218
    %v220 = vpop.xlane.xlu0 %219
    %v221 = vrot.slane %v220, 4
    %v222 = vadd.f32 %v220, %v221
    %v223 = vrot.slane %v222, 2
    %v224 = vadd.f32 %v222, %v223
    %v225 = vrot.slane %v224, 1
    %v226 = vadd.f32 %v224, %v225
    %s227 = vtos %v226
    %v228 = vrcp.pop 1920.0
    %v229 = vmul.f32 1920.0, %v228
    %v230 = vsub.f32 1.0, %v229
    %v231 = vmul.f32 %v228, %v230
    %v232 = vadd.f32 %v228, %v231
    %vm233 = vweird.f32 %v228
    %v234 = vsel %vm233, %v228, %v232
    %s235 = vtos %v234
    %s236 = smul.f32 %s227, %s235
    %v237 = vand.u32 2147483647, %v166
    %v238 = vand.u32 2147483647, %v167
    %241 = vrot.lane.b32.xlu0 %v237, 127
    %v242 = vpop.permute.xlu0 %241
    %243 = vrot.lane.b32.xlu0 %v238, 127
    %v244 = vpop.permute.xlu0 %243
    %vm247 = vcmask 1039360
    %v248 = vsel %vm247, %v242, 0.0
    %v249 = vsel %vm247, %v244, 0.0
    %v250 = vadd.f32 %v248, %v249
    %251 = vadd.xlane.f32.xlu0 %v250
    %v252 = vpop.xlane.xlu0 %251
    %v253 = vrot.slane %v252, 4
    %v254 = vadd.f32 %v252, %v253
    %v255 = vrot.slane %v254, 2
    %v256 = vadd.f32 %v254, %v255
    %v257 = vrot.slane %v256, 1
    %v258 = vadd.f32 %v256, %v257
    %s259 = vtos %v258
    %v260 = vrcp.pop 1920.0
    %v261 = vmul.f32 1920.0, %v260
    %v262 = vsub.f32 1.0, %v261
    %v263 = vmul.f32 %v260, %v262
    %v264 = vadd.f32 %v260, %v263
    %vm265 = vweird.f32 %v260
    %v266 = vsel %vm265, %v260, %v264
    %s267 = vtos %v266
    %s268 = smul.f32 %s259, %s267
    %v269 = vand.u32 2147483647, %v176
    %v270 = vand.u32 2147483647, %v177
    %273 = vrot.lane.b32.xlu0 %v269, 127
    %v274 = vpop.permute.xlu0 %273
    %275 = vrot.lane.b32.xlu0 %v270, 127
    %v276 = vpop.permute.xlu0 %275
    %v279 = vsel %vm247, %v274, 0.0
    %v280 = vsel %vm247, %v276, 0.0
    %v281 = vadd.f32 %v279, %v280
    %282 = vadd.xlane.f32.xlu0 %v281
    %v283 = vpop.xlane.xlu0 %282
    %v284 = vrot.slane %v283, 4
    %v285 = vadd.f32 %v283, %v284
    %v286 = vrot.slane %v285, 2
    %v287 = vadd.f32 %v285, %v286
    %v288 = vrot.slane %v287, 1
    %v289 = vadd.f32 %v287, %v288
    %s290 = vtos %v289
    %v291 = vrcp.pop 1920.0
    %v292 = vmul.f32 1920.0, %v291
    %v293 = vsub.f32 1.0, %v292
    %v294 = vmul.f32 %v291, %v293
    %v295 = vadd.f32 %v291, %v294
    %vm296 = vweird.f32 %v291
    %v297 = vsel %vm296, %v291, %v295
    %s298 = vtos %v297
    %s299 = smul.f32 %s290, %s298
    %s300 = smul.f32 %s207, 2.0
    %s301 = sadd.f32 %s236, 1e-06
    %v302 = vstv %s301
    %v303 = vrcp.pop %v302
    %v304 = vmul.f32 %v302, %v303
    %v305 = vsub.f32 1.0, %v304
    %v306 = vmul.f32 %v303, %v305
    %v307 = vadd.f32 %v303, %v306
    %vm308 = vweird.f32 %v302
    %vm309 = vweird.f32 %v303
    %vm310 = vmor %vm308, %vm309
    %v311 = vsel %vm310, %v303, %v307
    %v312 = vand.u32 2147483647, %v302
    %vm313 = vcmp.eq.f32.partialorder %v312, 8.507059e+37
    %v314 = vand.u32 %v302, 2147483648
    %v315 = vor.u32 1.1754944e-38, %v314
    %v316 = vsel %vm313, %v315, %v311
    %s317 = vtos %v316
    %s318 = smul.f32 %s300, %s317
    %s319 = smul.f32 %s268, 2.0
    %s320 = sadd.f32 %s299, 1e-06
    %v321 = vstv %s320
    %v322 = vrcp.pop %v321
    %v323 = vmul.f32 %v321, %v322
    %v324 = vsub.f32 1.0, %v323
    %v325 = vmul.f32 %v322, %v324
    %v326 = vadd.f32 %v322, %v325
    %vm327 = vweird.f32 %v321
    %vm328 = vweird.f32 %v322
    %vm329 = vmor %vm327, %vm328
    %v330 = vsel %vm329, %v322, %v326
    %v331 = vand.u32 2147483647, %v321
    %vm332 = vcmp.eq.f32.partialorder %v331, 8.507059e+37
    %v333 = vand.u32 %v321, 2147483648
    %v334 = vor.u32 1.1754944e-38, %v333
    %v335 = vsel %vm332, %v334, %v330
    %s336 = vtos %v335
    %s337 = smul.f32 %s319, %s336
    %v338 = vmul.f32 %v140, 0.5
    %v339 = vmul.f32 %v141, 0.5
    %v340 = vtanh.pop %v338
    %v341 = vtanh.pop %v339
    %s342 = smul.f32 %s318, 0.5
    %v343 = vstv %s342
    %v344 = vmul.f32 %v343, %v149
    %v345 = vmul.f32 %v343, %v150
    %v346 = vtanh.pop %v344
    %v347 = vtanh.pop %v345
    %v348 = vmul.f32 %v340, %v346
    %v349 = vmul.f32 %v341, %v347
    %v350 = vmul.f32 %v166, 0.5
    %v351 = vmul.f32 %v167, 0.5
    %v352 = vtanh.pop %v350
    %v353 = vtanh.pop %v351
    %s354 = smul.f32 %s337, 0.5
    %v355 = vstv %s354
    %v356 = vmul.f32 %v355, %v176
    %v357 = vmul.f32 %v355, %v177
    %v358 = vtanh.pop %v356
    %v359 = vtanh.pop %v357
    %v360 = vmul.f32 %v352, %v358
    %v361 = vmul.f32 %v353, %v359
    %v362 = vmul.f32 %v348, %v348
    %v363 = vmul.f32 %v349, %v349
    %v366 = vrot.slane %v362, 1
    %v367 = vrot.slane %v363, 1
    %v368 = vsel %vm182, %v366, %v367
    %v371 = vsel %vm182, %v367, 0.0
    %v372 = vadd.f32 %v368, %v371
    %373 = vadd.xlane.f32.xlu0 %v372
    %v374 = vpop.xlane.xlu0 %373
    %v375 = vrot.slane %v374, 4
    %v376 = vadd.f32 %v374, %v375
    %v377 = vrot.slane %v376, 2
    %v378 = vadd.f32 %v376, %v377
    %v379 = vrot.slane %v378, 1
    %v380 = vadd.f32 %v378, %v379
    %s381 = vtos %v380
    %v382 = vrcp.pop 1920.0
    %v383 = vmul.f32 1920.0, %v382
    %v384 = vsub.f32 1.0, %v383
    %v385 = vmul.f32 %v382, %v384
    %v386 = vadd.f32 %v382, %v385
    %vm387 = vweird.f32 %v382
    %v388 = vsel %vm387, %v382, %v386
    %s389 = vtos %v388
    %s390 = smul.f32 %s381, %s389
    %v391 = vmul.f32 %v360, %v360
    %v392 = vmul.f32 %v361, %v361
    %395 = vrot.lane.b32.xlu0 %v391, 127
    %v396 = vpop.permute.xlu0 %395
    %397 = vrot.lane.b32.xlu0 %v392, 127
    %v398 = vpop.permute.xlu0 %397
    %v401 = vsel %vm247, %v396, 0.0
    %v402 = vsel %vm247, %v398, 0.0
    %v403 = vadd.f32 %v401, %v402
    %404 = vadd.xlane.f32.xlu0 %v403
    %v405 = vpop.xlane.xlu0 %404
    %v406 = vrot.slane %v405, 4
    %v407 = vadd.f32 %v405, %v406
    %v408 = vrot.slane %v407, 2
    %v409 = vadd.f32 %v407, %v408
    %v410 = vrot.slane %v409, 1
    %v411 = vadd.f32 %v409, %v410
    %s412 = vtos %v411
    %v413 = vrcp.pop 1920.0
    %v414 = vmul.f32 1920.0, %v413
    %v415 = vsub.f32 1.0, %v414
    %v416 = vmul.f32 %v413, %v415
    %v417 = vadd.f32 %v413, %v416
    %vm418 = vweird.f32 %v413
    %v419 = vsel %vm418, %v413, %v417
    %s420 = vtos %v419
    %s421 = smul.f32 %s412, %s420
    %s422 = sadd.f32 %s390, 1e-06
    %v423 = vstv %s422
    %v424 = vrsqrt.pop %v423
    %v425 = vmul.f32 %v424, %v423
    %v426 = vmul.f32 %v425, %v424
    %v427 = vmul.f32 0.5, %v426
    %v428 = vsub.f32 1.5, %v427
    %v429 = vmul.f32 %v424, %v428
    %v430 = vmul.f32 %v423, %v429
    %vm431 = vcmp.eq.f32.partialorder %v423, inf
    %v432 = vsel %vm431, %v423, %v430
    %vm433 = vcmp.eq.f32.partialorder %v423, 0.0
    %v434 = vand.u32 %v423, 2147483648
    %v435 = vsel %vm433, %v434, %v432
    %s436 = vtos %v435
    %v437 = vstv %s436
    %v438 = vrsqrt.pop %v437
    %v439 = vmul.f32 %v438, %v437
    %v440 = vmul.f32 %v439, %v438
    %v441 = vmul.f32 0.5, %v440
    %v442 = vsub.f32 1.5, %v441
    %v443 = vmul.f32 %v438, %v442
    %v444 = vmul.f32 %v437, %v443
    %vm445 = vcmp.eq.f32.partialorder %v437, inf
    %v446 = vsel %vm445, %v437, %v444
    %vm447 = vcmp.eq.f32.partialorder %v437, 0.0
    %v448 = vand.u32 %v437, 2147483648
    %v449 = vsel %vm447, %v448, %v446
    %s450 = vtos %v449
    %s451 = sadd.f32 %s450, 0.0
    %s452 = sadd.f32 %s421, 1e-06
    %v453 = vstv %s452
    %v454 = vrsqrt.pop %v453
    %v455 = vmul.f32 %v454, %v453
    %v456 = vmul.f32 %v455, %v454
    %v457 = vmul.f32 0.5, %v456
    %v458 = vsub.f32 1.5, %v457
    %v459 = vmul.f32 %v454, %v458
    %v460 = vmul.f32 %v453, %v459
    %vm461 = vcmp.eq.f32.partialorder %v453, inf
    %v462 = vsel %vm461, %v453, %v460
    %vm463 = vcmp.eq.f32.partialorder %v453, 0.0
    %v464 = vand.u32 %v453, 2147483648
    %v465 = vsel %vm463, %v464, %v462
    %s466 = vtos %v465
    %v467 = vstv %s466
    %v468 = vrsqrt.pop %v467
    %v469 = vmul.f32 %v468, %v467
    %v470 = vmul.f32 %v469, %v468
    %v471 = vmul.f32 0.5, %v470
    %v472 = vsub.f32 1.5, %v471
    %v473 = vmul.f32 %v468, %v472
    %v474 = vmul.f32 %v467, %v473
    %vm475 = vcmp.eq.f32.partialorder %v467, inf
    %v476 = vsel %vm475, %v467, %v474
    %vm477 = vcmp.eq.f32.partialorder %v467, 0.0
    %v478 = vand.u32 %v467, 2147483648
    %v479 = vsel %vm477, %v478, %v476
    %s480 = vtos %v479
    %s481 = sadd.f32 %s480, 0.0
    %v482 = vpack.c.bf16 %v14, %v13
    %v483 = vpack.c.bf16 %v16, %v15
    %v486 = vunpack.c.l.b16 %v34
    %v487 = vunpack.c.l.b16 %v35
    %v488 = vpack.c.b16 %v487, %v486
    %vm489 = vcmask 261120
    %v491 = vsel %vm489, %v488, 0
    %493 = vmatpush.bf16.msra.mxu0 0
    %494 = vmatpush.bf16.msra.mxu0 0
    %495 = vmatpush.bf16.msra.mxu0 0
    %496 = vmatpush.bf16.msra.mxu0 0
    %497 = vmatpush.bf16.msra.mxu0 0
    %498 = vmatpush.bf16.msra.mxu0 0
    %499 = vmatpush.bf16.msra.mxu0 %v483
    %500 = vmatpush.bf16.msra.mxu0 %v482
    %501 = vmatmul.bf16.gmra.mxu0 %v491
    %v502 = vpop.f32.mrf.mxu0
    %v503 = vadd.f32 0.0, %v502
    %v504 = vpop.f32.mrf.mxu0
    %v505 = vadd.f32 0.0, %v504
    %506 = vdwg.mxu0
    %v507 = vpack.c.bf16 %v505, %v503
    %v524 = vunpack.c.l.b16 %v116
    %v525 = vunpack.c.l.b16 %v117
    %v526 = vunpack.c.l.b16 %v118
    %v527 = vunpack.c.l.b16 %v119
    %v528 = vunpack.c.l.b16 %v120
    %v529 = vunpack.c.l.b16 %v121
    %v530 = vunpack.c.l.b16 %v122
    %v531 = vunpack.c.l.b16 %v123
    %v532 = vunpack.c.l.b16 %v124
    %v533 = vunpack.c.l.b16 %v125
    %v534 = vunpack.c.l.b16 %v126
    %v535 = vunpack.c.l.b16 %v127
    %v536 = vunpack.c.l.b16 %v128
    %v537 = vunpack.c.l.b16 %v129
    %v538 = vunpack.c.l.b16 %v130
    %v539 = vunpack.c.l.b16 %v131
    %v540 = vpack.c.b16 %v525, %v524
    %v541 = vpack.c.b16 %v527, %v526
    %v542 = vpack.c.b16 %v529, %v528
    %v543 = vpack.c.b16 %v531, %v530
    %v544 = vpack.c.b16 %v533, %v532
    %v545 = vpack.c.b16 %v535, %v534
    %v546 = vpack.c.b16 %v537, %v536
    %v547 = vpack.c.b16 %v539, %v538
    %556 = vmatpush.bf16.msra.mxu0 %v547
    %557 = vmatpush.bf16.msra.mxu0 %v546
    %558 = vmatpush.bf16.msra.mxu0 %v545
    %559 = vmatpush.bf16.msra.mxu0 %v544
    %560 = vmatpush.bf16.msra.mxu0 %v543
    %561 = vmatpush.bf16.msra.mxu0 %v542
    %562 = vmatpush.bf16.msra.mxu0 %v541
    %563 = vmatpush.bf16.msra.mxu0 %v540
    %564 = vmatmul.bf16.gmra.mxu0 %v507
    %v565 = vpop.f32.mrf.mxu0
    %v566 = vadd.f32 0.0, %v565
    %v567 = vpop.f32.mrf.mxu0
    %v568 = vadd.f32 0.0, %v567
    %569 = vdwg.mxu0
    %v571 = vrot.slane %v566, 7
    %v573 = vsub.f32 %v566, %v571
    %v575 = vrot.slane %v568, 7
    %v577 = vsub.f32 %v568, %v575
    %v578 = vand.u32 %v21, 7
    %vm579 = vcmp.ne.s32.totalorder %v578, 7
    %v580 = vsel %vm579, 1.0, 0.0
    %581 = vrot.lane.b32.xlu0 %v566, 1
    %v582 = vpop.permute.xlu0 %581
    %v584 = vsub.f32 %v566, %v582
    %586 = vrot.lane.b32.xlu0 %v580, 1
    %v587 = vpop.permute.xlu0 %586
    %v589 = vmul.f32 %v584, %v587
    %590 = vrot.lane.b32.xlu0 %v568, 1
    %v591 = vpop.permute.xlu0 %590
    %v593 = vsub.f32 %v568, %v591
    %v594 = vmul.f32 %v593, %v587
    %v595 = vand.u32 2147483647, %v573
    %v597 = vrot.slane %v595, 1
    %vm599 = vcmask 522240
    %v600 = vsel %vm599, %v597, 0.0
    %601 = vadd.xlane.f32.xlu0 %v600
    %v602 = vpop.xlane.xlu0 %601
    %v603 = vrot.slane %v602, 4
    %v604 = vadd.f32 %v602, %v603
    %v605 = vrot.slane %v604, 2
    %v606 = vadd.f32 %v604, %v605
    %v607 = vrot.slane %v606, 1
    %v608 = vadd.f32 %v606, %v607
    %s609 = vtos %v608
    %v610 = vrcp.pop 448.0
    %v611 = vmul.f32 448.0, %v610
    %v612 = vsub.f32 1.0, %v611
    %v613 = vmul.f32 %v610, %v612
    %v614 = vadd.f32 %v610, %v613
    %vm615 = vweird.f32 %v610
    %v616 = vsel %vm615, %v610, %v614
    %s617 = vtos %v616
    %s618 = smul.f32 %s609, %s617
    %v619 = vand.u32 2147483647, %v577
    %v621 = vrot.slane %v619, 1
    %v623 = vsel %vm599, %v621, 0.0
    %624 = vadd.xlane.f32.xlu0 %v623
    %v625 = vpop.xlane.xlu0 %624
    %v626 = vrot.slane %v625, 4
    %v627 = vadd.f32 %v625, %v626
    %v628 = vrot.slane %v627, 2
    %v629 = vadd.f32 %v627, %v628
    %v630 = vrot.slane %v629, 1
    %v631 = vadd.f32 %v629, %v630
    %s632 = vtos %v631
    %v633 = vrcp.pop 448.0
    %v634 = vmul.f32 448.0, %v633
    %v635 = vsub.f32 1.0, %v634
    %v636 = vmul.f32 %v633, %v635
    %v637 = vadd.f32 %v633, %v636
    %vm638 = vweird.f32 %v633
    %v639 = vsel %vm638, %v633, %v637
    %s640 = vtos %v639
    %s641 = smul.f32 %s632, %s640
    %v642 = vand.u32 2147483647, %v589
    %644 = vrot.lane.b32.xlu0 %v642, 127
    %v645 = vpop.permute.xlu0 %644
    %vm647 = vcmask 515072
    %v648 = vsel %vm647, %v645, 0.0
    %649 = vadd.xlane.f32.xlu0 %v648
    %v650 = vpop.xlane.xlu0 %649
    %v651 = vrot.slane %v650, 4
    %v652 = vadd.f32 %v650, %v651
    %v653 = vrot.slane %v652, 2
    %v654 = vadd.f32 %v652, %v653
    %v655 = vrot.slane %v654, 1
    %v656 = vadd.f32 %v654, %v655
    %s657 = vtos %v656
    %v658 = vrcp.pop 448.0
    %v659 = vmul.f32 448.0, %v658
    %v660 = vsub.f32 1.0, %v659
    %v661 = vmul.f32 %v658, %v660
    %v662 = vadd.f32 %v658, %v661
    %vm663 = vweird.f32 %v658
    %v664 = vsel %vm663, %v658, %v662
    %s665 = vtos %v664
    %s666 = smul.f32 %s657, %s665
    %v667 = vand.u32 2147483647, %v594
    %669 = vrot.lane.b32.xlu0 %v667, 127
    %v670 = vpop.permute.xlu0 %669
    %v672 = vsel %vm647, %v670, 0.0
    %673 = vadd.xlane.f32.xlu0 %v672
    %v674 = vpop.xlane.xlu0 %673
    %v675 = vrot.slane %v674, 4
    %v676 = vadd.f32 %v674, %v675
    %v677 = vrot.slane %v676, 2
    %v678 = vadd.f32 %v676, %v677
    %v679 = vrot.slane %v678, 1
    %v680 = vadd.f32 %v678, %v679
    %s681 = vtos %v680
    %v682 = vrcp.pop 448.0
    %v683 = vmul.f32 448.0, %v682
    %v684 = vsub.f32 1.0, %v683
    %v685 = vmul.f32 %v682, %v684
    %v686 = vadd.f32 %v682, %v685
    %vm687 = vweird.f32 %v682
    %v688 = vsel %vm687, %v682, %v686
    %s689 = vtos %v688
    %s690 = smul.f32 %s681, %s689
    %s691 = smul.f32 %s618, 2.0
    %s692 = sadd.f32 %s641, 1e-06
    %v693 = vstv %s692
    %v694 = vrcp.pop %v693
    %v695 = vmul.f32 %v693, %v694
    %v696 = vsub.f32 1.0, %v695
    %v697 = vmul.f32 %v694, %v696
    %v698 = vadd.f32 %v694, %v697
    %vm699 = vweird.f32 %v693
    %vm700 = vweird.f32 %v694
    %vm701 = vmor %vm699, %vm700
    %v702 = vsel %vm701, %v694, %v698
    %v703 = vand.u32 2147483647, %v693
    %vm704 = vcmp.eq.f32.partialorder %v703, 8.507059e+37
    %v705 = vand.u32 %v693, 2147483648
    %v706 = vor.u32 1.1754944e-38, %v705
    %v707 = vsel %vm704, %v706, %v702
    %s708 = vtos %v707
    %s709 = smul.f32 %s691, %s708
    %s710 = smul.f32 %s666, 2.0
    %s711 = sadd.f32 %s690, 1e-06
    %v712 = vstv %s711
    %v713 = vrcp.pop %v712
    %v714 = vmul.f32 %v712, %v713
    %v715 = vsub.f32 1.0, %v714
    %v716 = vmul.f32 %v713, %v715
    %v717 = vadd.f32 %v713, %v716
    %vm718 = vweird.f32 %v712
    %vm719 = vweird.f32 %v713
    %vm720 = vmor %vm718, %vm719
    %v721 = vsel %vm720, %v713, %v717
    %v722 = vand.u32 2147483647, %v712
    %vm723 = vcmp.eq.f32.partialorder %v722, 8.507059e+37
    %v724 = vand.u32 %v712, 2147483648
    %v725 = vor.u32 1.1754944e-38, %v724
    %v726 = vsel %vm723, %v725, %v721
    %s727 = vtos %v726
    %s728 = smul.f32 %s710, %s727
    %v729 = vmul.f32 %v573, 0.5
    %v730 = vtanh.pop %v729
    %s731 = smul.f32 %s709, 0.5
    %v732 = vstv %s731
    %v733 = vmul.f32 %v732, %v577
    %v734 = vtanh.pop %v733
    %v735 = vmul.f32 %v730, %v734
    %v736 = vmul.f32 %v589, 0.5
    %v737 = vtanh.pop %v736
    %s738 = smul.f32 %s728, 0.5
    %v739 = vstv %s738
    %v740 = vmul.f32 %v739, %v594
    %v741 = vtanh.pop %v740
    %v742 = vmul.f32 %v737, %v741
    %v743 = vmul.f32 %v735, %v735
    %v745 = vrot.slane %v743, 1
    %v747 = vsel %vm599, %v745, 0.0
    %748 = vadd.xlane.f32.xlu0 %v747
    %v749 = vpop.xlane.xlu0 %748
    %v750 = vrot.slane %v749, 4
    %v751 = vadd.f32 %v749, %v750
    %v752 = vrot.slane %v751, 2
    %v753 = vadd.f32 %v751, %v752
    %v754 = vrot.slane %v753, 1
    %v755 = vadd.f32 %v753, %v754
    %s756 = vtos %v755
    %v757 = vrcp.pop 448.0
    %v758 = vmul.f32 448.0, %v757
    %v759 = vsub.f32 1.0, %v758
    %v760 = vmul.f32 %v757, %v759
    %v761 = vadd.f32 %v757, %v760
    %vm762 = vweird.f32 %v757
    %v763 = vsel %vm762, %v757, %v761
    %s764 = vtos %v763
    %s765 = smul.f32 %s756, %s764
    %v766 = vmul.f32 %v742, %v742
    %768 = vrot.lane.b32.xlu0 %v766, 127
    %v769 = vpop.permute.xlu0 %768
    %v771 = vsel %vm647, %v769, 0.0
    %772 = vadd.xlane.f32.xlu0 %v771
    %v773 = vpop.xlane.xlu0 %772
    %v774 = vrot.slane %v773, 4
    %v775 = vadd.f32 %v773, %v774
    %v776 = vrot.slane %v775, 2
    %v777 = vadd.f32 %v775, %v776
    %v778 = vrot.slane %v777, 1
    %v779 = vadd.f32 %v777, %v778
    %s780 = vtos %v779
    %v781 = vrcp.pop 448.0
    %v782 = vmul.f32 448.0, %v781
    %v783 = vsub.f32 1.0, %v782
    %v784 = vmul.f32 %v781, %v783
    %v785 = vadd.f32 %v781, %v784
    %vm786 = vweird.f32 %v781
    %v787 = vsel %vm786, %v781, %v785
    %s788 = vtos %v787
    %s789 = smul.f32 %s780, %s788
    %s790 = sadd.f32 %s765, 1e-06
    %v791 = vstv %s790
    %v792 = vrsqrt.pop %v791
    %v793 = vmul.f32 %v792, %v791
    %v794 = vmul.f32 %v793, %v792
    %v795 = vmul.f32 0.5, %v794
    %v796 = vsub.f32 1.5, %v795
    %v797 = vmul.f32 %v792, %v796
    %v798 = vmul.f32 %v791, %v797
    %vm799 = vcmp.eq.f32.partialorder %v791, inf
    %v800 = vsel %vm799, %v791, %v798
    %vm801 = vcmp.eq.f32.partialorder %v791, 0.0
    %v802 = vand.u32 %v791, 2147483648
    %v803 = vsel %vm801, %v802, %v800
    %s804 = vtos %v803
    %v805 = vstv %s804
    %v806 = vrsqrt.pop %v805
    %v807 = vmul.f32 %v806, %v805
    %v808 = vmul.f32 %v807, %v806
    %v809 = vmul.f32 0.5, %v808
    %v810 = vsub.f32 1.5, %v809
    %v811 = vmul.f32 %v806, %v810
    %v812 = vmul.f32 %v805, %v811
    %vm813 = vcmp.eq.f32.partialorder %v805, inf
    %v814 = vsel %vm813, %v805, %v812
    %vm815 = vcmp.eq.f32.partialorder %v805, 0.0
    %v816 = vand.u32 %v805, 2147483648
    %v817 = vsel %vm815, %v816, %v814
    %s818 = vtos %v817
    %s819 = sadd.f32 %s451, %s818
    %s820 = sadd.f32 %s789, 1e-06
    %v821 = vstv %s820
    %v822 = vrsqrt.pop %v821
    %v823 = vmul.f32 %v822, %v821
    %v824 = vmul.f32 %v823, %v822
    %v825 = vmul.f32 0.5, %v824
    %v826 = vsub.f32 1.5, %v825
    %v827 = vmul.f32 %v822, %v826
    %v828 = vmul.f32 %v821, %v827
    %vm829 = vcmp.eq.f32.partialorder %v821, inf
    %v830 = vsel %vm829, %v821, %v828
    %vm831 = vcmp.eq.f32.partialorder %v821, 0.0
    %v832 = vand.u32 %v821, 2147483648
    %v833 = vsel %vm831, %v832, %v830
    %s834 = vtos %v833
    %v835 = vstv %s834
    %v836 = vrsqrt.pop %v835
    %v837 = vmul.f32 %v836, %v835
    %v838 = vmul.f32 %v837, %v836
    %v839 = vmul.f32 0.5, %v838
    %v840 = vsub.f32 1.5, %v839
    %v841 = vmul.f32 %v836, %v840
    %v842 = vmul.f32 %v835, %v841
    %vm843 = vcmp.eq.f32.partialorder %v835, inf
    %v844 = vsel %vm843, %v835, %v842
    %vm845 = vcmp.eq.f32.partialorder %v835, 0.0
    %v846 = vand.u32 %v835, 2147483648
    %v847 = vsel %vm845, %v846, %v844
    %s848 = vtos %v847
    %s849 = sadd.f32 %s481, %s848
    %v850 = vpack.c.bf16 %v568, %v566
    %vm851 = vcmask 130048
    %v853 = vsel %vm851, %v34, 0
    %855 = vmatpush.bf16.msra.mxu0 0
    %856 = vmatpush.bf16.msra.mxu0 0
    %857 = vmatpush.bf16.msra.mxu0 0
    %858 = vmatpush.bf16.msra.mxu0 0
    %859 = vmatpush.bf16.msra.mxu0 0
    %860 = vmatpush.bf16.msra.mxu0 0
    %861 = vmatpush.bf16.msra.mxu0 0
    %862 = vmatpush.bf16.msra.mxu0 %v850
    %863 = vmatmul.bf16.gmra.mxu0 %v853
    %v864 = vpop.f32.mrf.mxu0
    %v865 = vadd.f32 0.0, %v864
    %v866 = vpop.f32.mrf.mxu0
    %867 = vdwg.mxu0
    %v868 = vpack.c.bf16 %v865, %v865
    %vm869 = vcmask 523264
    %v871 = vsel %vm869, %v868, 0
    %873 = vmatpush.bf16.msra.mxu0 0
    %874 = vmatpush.bf16.msra.mxu0 0
    %875 = vmatpush.bf16.msra.mxu0 0
    %876 = vmatpush.bf16.msra.mxu0 0
    %877 = vmatpush.bf16.msra.mxu0 %v543
    %878 = vmatpush.bf16.msra.mxu0 %v542
    %879 = vmatpush.bf16.msra.mxu0 %v541
    %880 = vmatpush.bf16.msra.mxu0 %v540
    %881 = vmatmul.bf16.gmra.mxu0 %v871
    %v882 = vpop.f32.mrf.mxu0
    %v883 = vadd.f32 0.0, %v882
    %v884 = vpop.f32.mrf.mxu0
    %885 = vdwg.mxu0
    %v887 = vrot.slane %v883, 7
    %v889 = vsub.f32 %v883, %v887
    %v890 = vand.u32 %v21, 3
    %vm891 = vcmp.ne.s32.totalorder %v890, 3
    %v892 = vsel %vm891, 1.0, 0.0
    %893 = vrot.lane.b32.xlu0 %v883, 1
    %v894 = vpop.permute.xlu0 %893
    %v896 = vsub.f32 %v883, %v894
    %898 = vrot.lane.b32.xlu0 %v892, 1
    %v899 = vpop.permute.xlu0 %898
    %v901 = vmul.f32 %v896, %v899
    %v902 = vand.u32 2147483647, %v889
    %v904 = vrot.slane %v902, 1
    %vm906 = vcmask 256000
    %v907 = vsel %vm906, %v904, 0.0
    %908 = vadd.xlane.f32.xlu0 %v907
    %v909 = vpop.xlane.xlu0 %908
    %v910 = vrot.slane %v909, 4
    %v911 = vadd.f32 %v909, %v910
    %v912 = vrot.slane %v911, 2
    %v913 = vadd.f32 %v911, %v912
    %v914 = vrot.slane %v913, 1
    %v915 = vadd.f32 %v913, %v914
    %s916 = vtos %v915
    %v917 = vrcp.pop 96.0
    %v918 = vmul.f32 96.0, %v917
    %v919 = vsub.f32 1.0, %v918
    %v920 = vmul.f32 %v917, %v919
    %v921 = vadd.f32 %v917, %v920
    %vm922 = vweird.f32 %v917
    %v923 = vsel %vm922, %v917, %v921
    %s924 = vtos %v923
    %s925 = smul.f32 %s916, %s924
    %v926 = vrot.slane %v902, 5
    %v928 = vsel %vm906, %v926, 0.0
    %929 = vadd.xlane.f32.xlu0 %v928
    %v930 = vpop.xlane.xlu0 %929
    %v931 = vrot.slane %v930, 4
    %v932 = vadd.f32 %v930, %v931
    %v933 = vrot.slane %v932, 2
    %v934 = vadd.f32 %v932, %v933
    %v935 = vrot.slane %v934, 1
    %v936 = vadd.f32 %v934, %v935
    %s937 = vtos %v936
    %v938 = vrcp.pop 96.0
    %v939 = vmul.f32 96.0, %v938
    %v940 = vsub.f32 1.0, %v939
    %v941 = vmul.f32 %v938, %v940
    %v942 = vadd.f32 %v938, %v941
    %vm943 = vweird.f32 %v938
    %v944 = vsel %vm943, %v938, %v942
    %s945 = vtos %v944
    %s946 = smul.f32 %s937, %s945
    %v947 = vand.u32 2147483647, %v901
    %949 = vrot.lane.b32.xlu0 %v947, 127
    %v950 = vpop.permute.xlu0 %949
    %vm952 = vcmask 248832
    %v953 = vsel %vm952, %v950, 0.0
    %954 = vadd.xlane.f32.xlu0 %v953
    %v955 = vpop.xlane.xlu0 %954
    %v956 = vrot.slane %v955, 4
    %v957 = vadd.f32 %v955, %v956
    %v958 = vrot.slane %v957, 2
    %v959 = vadd.f32 %v957, %v958
    %v960 = vrot.slane %v959, 1
    %v961 = vadd.f32 %v959, %v960
    %s962 = vtos %v961
    %v963 = vrcp.pop 96.0
    %v964 = vmul.f32 96.0, %v963
    %v965 = vsub.f32 1.0, %v964
    %v966 = vmul.f32 %v963, %v965
    %v967 = vadd.f32 %v963, %v966
    %vm968 = vweird.f32 %v963
    %v969 = vsel %vm968, %v963, %v967
    %s970 = vtos %v969
    %s971 = smul.f32 %s962, %s970
    %v972 = vrot.slane %v947, 4
    %973 = vrot.lane.b32.xlu0 %v972, 127
    %v974 = vpop.permute.xlu0 %973
    %v976 = vsel %vm952, %v974, 0.0
    %977 = vadd.xlane.f32.xlu0 %v976
    %v978 = vpop.xlane.xlu0 %977
    %v979 = vrot.slane %v978, 4
    %v980 = vadd.f32 %v978, %v979
    %v981 = vrot.slane %v980, 2
    %v982 = vadd.f32 %v980, %v981
    %v983 = vrot.slane %v982, 1
    %v984 = vadd.f32 %v982, %v983
    %s985 = vtos %v984
    %v986 = vrcp.pop 96.0
    %v987 = vmul.f32 96.0, %v986
    %v988 = vsub.f32 1.0, %v987
    %v989 = vmul.f32 %v986, %v988
    %v990 = vadd.f32 %v986, %v989
    %vm991 = vweird.f32 %v986
    %v992 = vsel %vm991, %v986, %v990
    %s993 = vtos %v992
    %s994 = smul.f32 %s985, %s993
    %s995 = smul.f32 %s925, 2.0
    %s996 = sadd.f32 %s946, 1e-06
    %v997 = vstv %s996
    %v998 = vrcp.pop %v997
    %v999 = vmul.f32 %v997, %v998
    %v1000 = vsub.f32 1.0, %v999
    %v1001 = vmul.f32 %v998, %v1000
    %v1002 = vadd.f32 %v998, %v1001
    %vm1003 = vweird.f32 %v997
    %vm1004 = vweird.f32 %v998
    %vm1005 = vmor %vm1003, %vm1004
    %v1006 = vsel %vm1005, %v998, %v1002
    %v1007 = vand.u32 2147483647, %v997
    %vm1008 = vcmp.eq.f32.partialorder %v1007, 8.507059e+37
    %v1009 = vand.u32 %v997, 2147483648
    %v1010 = vor.u32 1.1754944e-38, %v1009
    %v1011 = vsel %vm1008, %v1010, %v1006
    %s1012 = vtos %v1011
    %s1013 = smul.f32 %s995, %s1012
    %s1014 = smul.f32 %s971, 2.0
    %s1015 = sadd.f32 %s994, 1e-06
    %v1016 = vstv %s1015
    %v1017 = vrcp.pop %v1016
    %v1018 = vmul.f32 %v1016, %v1017
    %v1019 = vsub.f32 1.0, %v1018
    %v1020 = vmul.f32 %v1017, %v1019
    %v1021 = vadd.f32 %v1017, %v1020
    %vm1022 = vweird.f32 %v1016
    %vm1023 = vweird.f32 %v1017
    %vm1024 = vmor %vm1022, %vm1023
    %v1025 = vsel %vm1024, %v1017, %v1021
    %v1026 = vand.u32 2147483647, %v1016
    %vm1027 = vcmp.eq.f32.partialorder %v1026, 8.507059e+37
    %v1028 = vand.u32 %v1016, 2147483648
    %v1029 = vor.u32 1.1754944e-38, %v1028
    %v1030 = vsel %vm1027, %v1029, %v1025
    %s1031 = vtos %v1030
    %s1032 = smul.f32 %s1014, %s1031
    %v1033 = vmul.f32 %v889, 0.5
    %v1034 = vtanh.pop %v1033
    %s1035 = smul.f32 %s1013, 0.5
    %v1036 = vstv %s1035
    %v1037 = vmul.f32 %v1036, %v889
    %v1038 = vtanh.pop %v1037
    %v1040 = vrot.slane %v1038, 4
    %v1042 = vmul.f32 %v1034, %v1040
    %v1043 = vmul.f32 %v901, 0.5
    %v1044 = vtanh.pop %v1043
    %s1045 = smul.f32 %s1032, 0.5
    %v1046 = vstv %s1045
    %v1047 = vmul.f32 %v1046, %v901
    %v1048 = vtanh.pop %v1047
    %v1050 = vrot.slane %v1048, 4
    %v1052 = vmul.f32 %v1044, %v1050
    %v1053 = vmul.f32 %v1042, %v1042
    %v1055 = vrot.slane %v1053, 1
    %v1057 = vsel %vm906, %v1055, 0.0
    %1058 = vadd.xlane.f32.xlu0 %v1057
    %v1059 = vpop.xlane.xlu0 %1058
    %v1060 = vrot.slane %v1059, 4
    %v1061 = vadd.f32 %v1059, %v1060
    %v1062 = vrot.slane %v1061, 2
    %v1063 = vadd.f32 %v1061, %v1062
    %v1064 = vrot.slane %v1063, 1
    %v1065 = vadd.f32 %v1063, %v1064
    %s1066 = vtos %v1065
    %v1067 = vrcp.pop 96.0
    %v1068 = vmul.f32 96.0, %v1067
    %v1069 = vsub.f32 1.0, %v1068
    %v1070 = vmul.f32 %v1067, %v1069
    %v1071 = vadd.f32 %v1067, %v1070
    %vm1072 = vweird.f32 %v1067
    %v1073 = vsel %vm1072, %v1067, %v1071
    %s1074 = vtos %v1073
    %s1075 = smul.f32 %s1066, %s1074
    %v1076 = vmul.f32 %v1052, %v1052
    %1078 = vrot.lane.b32.xlu0 %v1076, 127
    %v1079 = vpop.permute.xlu0 %1078
    %v1081 = vsel %vm952, %v1079, 0.0
    %1082 = vadd.xlane.f32.xlu0 %v1081
    %v1083 = vpop.xlane.xlu0 %1082
    %v1084 = vrot.slane %v1083, 4
    %v1085 = vadd.f32 %v1083, %v1084
    %v1086 = vrot.slane %v1085, 2
    %v1087 = vadd.f32 %v1085, %v1086
    %v1088 = vrot.slane %v1087, 1
    %v1089 = vadd.f32 %v1087, %v1088
    %s1090 = vtos %v1089
    %v1091 = vrcp.pop 96.0
    %v1092 = vmul.f32 96.0, %v1091
    %v1093 = vsub.f32 1.0, %v1092
    %v1094 = vmul.f32 %v1091, %v1093
    %v1095 = vadd.f32 %v1091, %v1094
    %vm1096 = vweird.f32 %v1091
    %v1097 = vsel %vm1096, %v1091, %v1095
    %s1098 = vtos %v1097
    %s1099 = smul.f32 %s1090, %s1098
    %s1100 = sadd.f32 %s1075, 1e-06
    %v1101 = vstv %s1100
    %v1102 = vrsqrt.pop %v1101
    %v1103 = vmul.f32 %v1102, %v1101
    %v1104 = vmul.f32 %v1103, %v1102
    %v1105 = vmul.f32 0.5, %v1104
    %v1106 = vsub.f32 1.5, %v1105
    %v1107 = vmul.f32 %v1102, %v1106
    %v1108 = vmul.f32 %v1101, %v1107
    %vm1109 = vcmp.eq.f32.partialorder %v1101, inf
    %v1110 = vsel %vm1109, %v1101, %v1108
    %vm1111 = vcmp.eq.f32.partialorder %v1101, 0.0
    %v1112 = vand.u32 %v1101, 2147483648
    %v1113 = vsel %vm1111, %v1112, %v1110
    %s1114 = vtos %v1113
    %v1115 = vstv %s1114
    %v1116 = vrsqrt.pop %v1115
    %v1117 = vmul.f32 %v1116, %v1115
    %v1118 = vmul.f32 %v1117, %v1116
    %v1119 = vmul.f32 0.5, %v1118
    %v1120 = vsub.f32 1.5, %v1119
    %v1121 = vmul.f32 %v1116, %v1120
    %v1122 = vmul.f32 %v1115, %v1121
    %vm1123 = vcmp.eq.f32.partialorder %v1115, inf
    %v1124 = vsel %vm1123, %v1115, %v1122
    %vm1125 = vcmp.eq.f32.partialorder %v1115, 0.0
    %v1126 = vand.u32 %v1115, 2147483648
    %v1127 = vsel %vm1125, %v1126, %v1124
    %s1128 = vtos %v1127
    %s1129 = sadd.f32 %s819, %s1128
    %s1130 = sadd.f32 %s1099, 1e-06
    %v1131 = vstv %s1130
    %v1132 = vrsqrt.pop %v1131
    %v1133 = vmul.f32 %v1132, %v1131
    %v1134 = vmul.f32 %v1133, %v1132
    %v1135 = vmul.f32 0.5, %v1134
    %v1136 = vsub.f32 1.5, %v1135
    %v1137 = vmul.f32 %v1132, %v1136
    %v1138 = vmul.f32 %v1131, %v1137
    %vm1139 = vcmp.eq.f32.partialorder %v1131, inf
    %v1140 = vsel %vm1139, %v1131, %v1138
    %vm1141 = vcmp.eq.f32.partialorder %v1131, 0.0
    %v1142 = vand.u32 %v1131, 2147483648
    %v1143 = vsel %vm1141, %v1142, %v1140
    %s1144 = vtos %v1143
    %v1145 = vstv %s1144
    %v1146 = vrsqrt.pop %v1145
    %v1147 = vmul.f32 %v1146, %v1145
    %v1148 = vmul.f32 %v1147, %v1146
    %v1149 = vmul.f32 0.5, %v1148
    %v1150 = vsub.f32 1.5, %v1149
    %v1151 = vmul.f32 %v1146, %v1150
    %v1152 = vmul.f32 %v1145, %v1151
    %vm1153 = vcmp.eq.f32.partialorder %v1145, inf
    %v1154 = vsel %vm1153, %v1145, %v1152
    %vm1155 = vcmp.eq.f32.partialorder %v1145, 0.0
    %v1156 = vand.u32 %v1145, 2147483648
    %v1157 = vsel %vm1155, %v1156, %v1154
    %s1158 = vtos %v1157
    %s1159 = sadd.f32 %s849, %s1158
    %v1160 = vrcp.pop 3.0
    %v1161 = vmul.f32 3.0, %v1160
    %v1162 = vsub.f32 1.0, %v1161
    %v1163 = vmul.f32 %v1160, %v1162
    %v1164 = vadd.f32 %v1160, %v1163
    %vm1165 = vweird.f32 %v1160
    %v1166 = vsel %vm1165, %v1160, %v1164
    %s1167 = vtos %v1166
    %s1168 = smul.f32 %s1129, %s1167
    %v1169 = vrcp.pop 3.0
    %v1170 = vmul.f32 3.0, %v1169
    %v1171 = vsub.f32 1.0, %v1170
    %v1172 = vmul.f32 %v1169, %v1171
    %v1173 = vadd.f32 %v1169, %v1172
    %vm1174 = vweird.f32 %v1169
    %v1175 = vsel %vm1174, %v1169, %v1173
    %s1176 = vtos %v1175
    %s1177 = smul.f32 %s1159, %s1176
    %s1178 = sadd.f32 %s1168, %s1177
    %s1179 = smul.f32 %s1178, 0.5
    %s1180 = scalar_lea.smem [#allocation2], 0
    %1181 = sst [smem:[%s1180]] %s1179
    // Predicated region
    $region10: #{exclusion_loss.1} parent=1 // pred_check
      _
    $region11: #{exclusion_loss.1} parent=1 // pred_check_branch
      %1183 = sbr.rel (0) target = $region13
    $region12: #{exclusion_loss.1} parent=1 // pred_region
      %1185 = vsyncadd [#allocation3], 0
      %s1187 = sshll.u32 %s2, 4
      %s1188 = int_to_ptr.hbm [resolvable:$true] %s1187
      %1190 = dma.smem_to_hbm [#allocation2], 16, %s1188, [#allocation3]
    $region13: #{exclusion_loss.1} parent=1 // pred_fallthru
      _
    // Predicated region
    $region14: #{exclusion_loss.1} parent=1 // pred_check
      _
    $region15: #{exclusion_loss.1} parent=1 // pred_check_branch
      %1192 = sbr.rel (0) target = $region17
    $region16: #{exclusion_loss.1} parent=1 // pred_region
      %1194 = dma.done [#allocation3], 16
    $region17: #{exclusion_loss.1} parent=1 // pred_fallthru
      _
    %1195 = sfence
    %1196 = vsyncpa [#allocation3], 1

</llo_original>
